<compile_context>
chip_gen: v6e
topology: v6e:2x2x1
jax: 0.10.0
libtpu: 0.0.40
codegen_flags: <defaults>
</compile_context>

<pallas_src>
import numpy as np
import jax
import jax.numpy as jnp
from jax import lax
from jax.experimental import pallas as pl
from jax.experimental.pallas import tpu as pltpu

# ----------------------------------------------------------------------------
# Constants (small analogs of the original 300/1024 sizes, same derivations)
# ----------------------------------------------------------------------------
Nx_slm = Ny_slm = 32
Nx_cam = Ny_cam = 32
Nx, Ny = Nx_cam, Ny_cam
Nx_bpm = Ny_bpm = 128          # used only to derive the bpm->cam resize, as in the original
dx_bpm = dy_bpm = 4e-06
dx_cam = dy_cam = 8e-06
dx_slm = dy_slm = 8e-06

ny_nx_bpm2cam = (int(Ny_bpm * dy_bpm / dy_cam), int(Nx_bpm * dx_bpm / dx_cam))  # (64, 64)
nx = ny_nx_bpm2cam[1]
x_start = (nx - Nx) // 2
ny = ny_nx_bpm2cam[0]
y_start = (ny - Ny) // 2
crop_bpm2cam = (int(y_start), int(y_start + Ny), int(x_start), int(x_start + Nx))
ny_nx_slm2bpm = (int(Ny_slm * dy_slm / dy_bpm), int(Nx_slm * dx_slm / dx_bpm))  # (64, 64)
pad_slm2bpm = (int(x_start), int(Nx - x_start - nx), int(y_start), int(Ny - y_start - ny))

# Resulting BPM grid size after interpolate + (possibly negative) pad
N_BPM = ny_nx_slm2bpm[0] + pad_slm2bpm[2] + pad_slm2bpm[3]  # 32
assert N_BPM == ny_nx_slm2bpm[1] + pad_slm2bpm[0] + pad_slm2bpm[1]

MOD_SPACING = (1, 2, 1, 2, 1, 2, 1, 2)   # 8 propagation segments (static ints)
N_STEPS = int(sum(MOD_SPACING))          # 12 propagation steps in total

# f32 matmuls (multi-pass MXU) keep the 12 chained DFT pairs within tolerance;
# bf16 (with BG=4) is the next step after on-hardware re-validation (see TODO).
MXU_DTYPE = jnp.float32

BT = 4                                   # batch items packed along lanes  (BT*N = 128)
BG = 2                                   # batch groups stacked along sublanes (BG*N = 64)
IPG = BG * BT                            # batch items per grid step
W_PACK = BT * N_BPM                      # 128 packed lane width
H_PACK = BG * N_BPM                      # 64  packed sublane height


def _step_mod_schedule(mod_spacing):
    """Which modulation (0..6) is applied after each of the 12 prop steps; None = identity."""
    sched = [None] * int(sum(mod_spacing))
    s = 0
    for seg in range(len(mod_spacing)):
        s += int(mod_spacing[seg])
        if seg < len(mod_spacing) - 1:
            sched[s - 1] = seg
    return tuple(sched)


STEP_MOD = _step_mod_schedule(MOD_SPACING)


# ----------------------------------------------------------------------------
# field_interpolate: nearest-neighbor resize (PyTorch F.interpolate default)
# + constant pad (negative pad == crop, like F.pad) / crop.  Glue, plain JAX.
# ----------------------------------------------------------------------------
def _nearest_resize(x, size):
    H, W = x.shape[-2], x.shape[-1]
    oh, ow = size
    iy = (np.arange(oh) * H) // oh  # floor(i * in / out) == torch nearest
    ix = (np.arange(ow) * W) // ow
    return x[..., iy[:, None], ix[None, :]]


def _pad_or_crop(x, pad, value):
    l, r, t, b = pad
    H, W = x.shape[-2], x.shape[-1]
    x = x[..., max(0, -t): H - max(0, -b), max(0, -l): W - max(0, -r)]
    return jnp.pad(
        x,
        ((0, 0), (0, 0), (max(0, t), max(0, b)), (max(0, l), max(0, r))),
        constant_values=value,
    )


def field_interpolate(arr_in, size, pad=None, crop=None, amplitude_pad_value=0.0):
    assert (pad is None) ^ (crop is None)
    assert arr_in.ndim == 4
    if jnp.iscomplexobj(arr_in):
        amp = jnp.abs(arr_in)
        ph = jnp.angle(arr_in)
        a = _nearest_resize(amp, size)
        p = _nearest_resize(ph, size)
        if pad is not None:
            a = _pad_or_crop(a, pad, amplitude_pad_value)
            p = _pad_or_crop(p, pad, 0.0)
        else:
            a = a[:, :, crop[0]:crop[1], crop[2]:crop[3]]
            p = p[:, :, crop[0]:crop[1], crop[2]:crop[3]]
        return a * jnp.exp(1j * p)
    else:
        t = _nearest_resize(arr_in, size)
        if pad is not None:
            return _pad_or_crop(t, pad, 0.0)
        return t[:, :, crop[0]:crop[1], crop[2]:crop[3]]


# ----------------------------------------------------------------------------
# Pallas kernel: full BPM propagation chain on a batch-packed (H_PACK, W_PACK)
# slab holding BG x BT = 8 batch items.
#   u0 -> fori_loop over 12 steps of [prop; * per-step mod] -> |u|^2
# prop step = ifft2(fft2(u) * DFR) * super_gaussian
# fft2 via (unitary-scaled) DFT matmuls: FL @ U @ FR with block-diagonal
# kron(eye(BG), F/sqrt(N)) / kron(eye(BT), F/sqrt(N)); ifft2 with conj(F)/sqrt(N).
# ----------------------------------------------------------------------------
def _bpm_kernel(mods_ref, cp_ref, fl_ref, fr_ref, out_ref):
    # mods_ref: (2*N_STEPS, H, W)  per-step mods [r0,i0,r1,i1,...]  (batched)
    # cp_ref  : (5, H, W)          [u0r, u0i, DFRr, DFRi, SG]       (invariant)
    # fl_ref  : (6, H, H)          kron(I_BG, .) of [Fr,Fi,Fr+Fi,Gr,Gi,Gr+Gi]
    # fr_ref  : (6, W, W)          kron(I_BT, .) of the same six matrices
    #           F = DFT/sqrt(N), G = conj(DFT)/sqrt(N)  (magnitude preserving)
    def mmf(a, b):
        return jnp.dot(a.astype(MXU_DTYPE), b.astype(MXU_DTYPE),
                       preferred_element_type=jnp.float32)

    def cmm_left(base, br, bi):
        # (constant complex matrix) @ (b_r + i b_i), Gauss 3-mult; matrix sums precomputed.
        t1 = mmf(fl_ref[base], br)
        t2 = mmf(fl_ref[base + 1], bi)
        t3 = mmf(fl_ref[base + 2], br + bi)
        return t1 - t2, t3 - t1 - t2

    def cmm_right(ar, ai, base):
        t1 = mmf(ar, fr_ref[base])
        t2 = mmf(ai, fr_ref[base + 1])
        t3 = mmf(ar + ai, fr_ref[base + 2])
        return t1 - t2, t3 - t1 - t2

    def step(s, carry):
        ur, ui = carry
        # fft2 (unitary scaling): FL @ U @ FR
        tr, ti = cmm_left(0, ur, ui)
        sr, si = cmm_right(tr, ti, 0)
        # * DFR (angular-spectrum transfer function), complex elementwise (f32)
        dr = cp_ref[2]
        di = cp_ref[3]
        pr = sr * dr - si * di
        pi = sr * di + si * dr
        # ifft2 (unitary scaling): GL @ P @ GR
        tr, ti = cmm_left(3, pr, pi)
        rr, ri = cmm_right(tr, ti, 3)
        # * super-gaussian absorbing window (real, f32)
        sg = cp_ref[4]
        rr = rr * sg
        ri = ri * sg
        # * per-step modulation (identity planes on spacing-only steps)
        mr = mods_ref[2 * s]
        mi = mods_ref[2 * s + 1]
        return rr * mr - ri * mi, rr * mi + ri * mr

    ur, ui = lax.fori_loop(0, N_STEPS, step, (cp_ref[0], cp_ref[1]))
    out_ref[...] = ur * ur + ui * ui            # |field|^2, lane-dense (H, W)


def bpm_propagate(step_mods_packed, const_planes, f_left, f_right):
    G = step_mods_packed.shape[0]
    H, W = H_PACK, W_PACK
    return pl.pallas_call(
        _bpm_kernel,
        out_shape=jax.ShapeDtypeStruct((G, H, W), jnp.float32),
        grid=(G,),
        in_specs=[
            # per-step mods (batched, one block per grid step)
            pl.BlockSpec((None, 2 * N_STEPS, H, W), lambda g: (g, 0, 0, 0)),
            # batch-invariant planes / weights (constant index maps -> fetched once)
            pl.BlockSpec((5, H, W), lambda g: (0, 0, 0)),
            pl.BlockSpec((6, H, H), lambda g: (0, 0, 0)),
            pl.BlockSpec((6, W, W), lambda g: (0, 0, 0)),
        ],
        out_specs=pl.BlockSpec((None, H, W), lambda g: (g, 0, 0)),
        compiler_params=pltpu.CompilerParams(dimension_semantics=("parallel",)),
    )(step_mods_packed, const_planes, f_left, f_right)


# ----------------------------------------------------------------------------
# Parameter / fixed-tensor construction (deterministic, synthetic)
# ----------------------------------------------------------------------------
def _tile_group(x2d):
    """(N, N) -> (BG*N, BT*N): same plane replicated for every packed batch item."""
    return jnp.tile(x2d.astype(jnp.float32), (BG, BT))


def build_params_and_consts():
    key = jax.random.PRNGKey(0)
    keys = jax.random.split(key, 12)

    phase_scale = [jax.random.normal(keys[i], (1, 1, Ny_slm, Nx_slm), jnp.float32)
                   for i in range(4)]
    phase_bias = [jax.random.normal(keys[4 + i], (1, 1, Ny_slm, Nx_slm), jnp.float32)
                  for i in range(4)]

    # Gaussian beam on SLM grid -> interpolated/padded onto the BPM grid.
    ys = (np.arange(Ny_slm) - Ny_slm / 2 + 0.5) * dy_slm
    xs = (np.arange(Nx_slm) - Nx_slm / 2 + 0.5) * dx_slm
    yy, xx = np.meshgrid(ys, xs, indexing="ij")
    w0 = Nx_slm * dx_slm / 4.0
    gb_slm = np.exp(-(xx ** 2 + yy ** 2) / (w0 ** 2)).astype(np.complex64)
    gaussian_beam_slm = jnp.asarray(gb_slm)[None, None]
    field_in = field_interpolate(gaussian_beam_slm, size=ny_nx_slm2bpm,
                                 pad=pad_slm2bpm)                            # (1,1,NB,NB) c64

    # Fixed (non-learned) modulation masks mod_00/02/04/06 = exp(i * phase)
    fixed_mods_c = []
    for i in range(4):
        ph = jax.random.normal(keys[8 + i], (1, 1, N_BPM, N_BPM), jnp.float32)
        fixed_mods_c.append(jnp.exp(1j * ph))
    mod_00, mod_02, mod_04, mod_06 = fixed_mods_c

    # Angular-spectrum free-space transfer function DFR (pure phase, complex64)
    lam = 633e-9
    dz = 50e-6
    k0 = 2.0 * np.pi / lam
    fx = np.fft.fftfreq(N_BPM, d=dx_bpm)
    fy = np.fft.fftfreq(N_BPM, d=dy_bpm)
    kx = 2.0 * np.pi * fx[None, :]
    ky = 2.0 * np.pi * fy[:, None]
    kz2 = np.maximum(k0 ** 2 - kx ** 2 - ky ** 2, 0.0)
    dfr = np.exp(1j * np.sqrt(kz2) * dz).astype(np.complex64)
    DFR_r = jnp.asarray(np.real(dfr), jnp.float32)
    DFR_i = jnp.asarray(np.imag(dfr), jnp.float32)

    # Super-Gaussian absorbing window (real)
    yb = (np.arange(N_BPM) - N_BPM / 2 + 0.5)
    xb = (np.arange(N_BPM) - N_BPM / 2 + 0.5)
    yyb, xxb = np.meshgrid(yb, xb, indexing="ij")
    rr = np.sqrt(xxb ** 2 + yyb ** 2) / (0.45 * N_BPM)
    super_gaussian = np.exp(-(rr ** 8)).astype(np.float32)
    SG = jnp.asarray(super_gaussian)

    # Unitary-scaled DFT matrices: forward F/sqrt(N), inverse conj(F)/sqrt(N).
    # (Composition equals fft2 -> ifft2 exactly; per-side scaling keeps field
    #  magnitudes flat through the chain — prerequisite for the bf16 switch.)
    N = N_BPM
    jk = np.outer(np.arange(N), np.arange(N)).astype(np.float64)
    ang = -2.0 * np.pi * jk / N
    scale = 1.0 / np.sqrt(N)
    Fr = (np.cos(ang) * scale).astype(np.float32)
    Fi = (np.sin(ang) * scale).astype(np.float32)
    Gr = Fr                                   # conj(F)/sqrt(N) real part
    Gi = -Fi                                  # conj(F)/sqrt(N) imag part

    def _kron_stack(reps):
        eye = np.eye(reps, dtype=np.float32)
        mats = [np.kron(eye, m) for m in (Fr, Fi, Fr + Fi, Gr, Gi, Gr + Gi)]
        return jnp.asarray(np.stack(mats, axis=0)).astype(MXU_DTYPE)

    f_left = _kron_stack(BG)                  # (6, H_PACK, H_PACK)
    f_right = _kron_stack(BT)                 # (6, W_PACK, W_PACK)

    # Batch-invariant packed planes: u0 = field_in * mod_00, DFR, SG.
    u0 = field_in * mod_00                                                   # (1,1,NB,NB)
    const_planes = jnp.stack([
        _tile_group(jnp.real(u0)[0, 0]), _tile_group(jnp.imag(u0)[0, 0]),
        _tile_group(DFR_r), _tile_group(DFR_i), _tile_group(SG)], axis=0)    # (5, H, W)

    params = {"phase_scale": phase_scale, "phase_bias": phase_bias}
    consts = {
        # packed tensors consumed by the Pallas kernel
        "const_planes": const_planes,
        "f_left": f_left,
        "f_right": f_right,
        # raw tensors (also used by the pure-JAX reference)
        "field_in": field_in,
        "mod_00": mod_00, "mod_02": mod_02, "mod_04": mod_04, "mod_06": mod_06,
        "DFR_r": DFR_r, "DFR_i": DFR_i, "SG": SG,
        "mod_spacing": MOD_SPACING,
    }
    return params, consts


# ----------------------------------------------------------------------------
# Forward pass (mirrors SZZBPM.forward)
# ----------------------------------------------------------------------------
def szzbpm_forward(input_img, params, consts):
    B = input_img.shape[0]
    N = N_BPM

    # Learned phase modulations (mod_01, mod_03, mod_05, mod_07) as cos/sin planes.
    lcos, lsin = [], []
    for k in range(4):
        phase_slm = input_img * params["phase_scale"][k] + params["phase_bias"][k]
        phase_bpm = field_interpolate(phase_slm, size=ny_nx_slm2bpm, pad=pad_slm2bpm)[:, 0]
        lcos.append(jnp.cos(phase_bpm))                       # (B, N, N)
        lsin.append(jnp.sin(phase_bpm))

    # Pad batch to a whole number of packed groups (BG x BT items each).
    B_pad = ((B + IPG - 1) // IPG) * IPG
    G = B_pad // IPG
    pad_b = B_pad - B
    if pad_b:
        lcos = [jnp.pad(c, ((0, pad_b), (0, 0), (0, 0))) for c in lcos]
        lsin = [jnp.pad(s, ((0, pad_b), (0, 0), (0, 0))) for s in lsin]

    # Per-step modulation stack: identity on spacing-only steps, learned
    # (batched) / fixed (broadcast) complex mods on segment boundaries.
    ident = jnp.stack([jnp.ones((N, N), jnp.float32), jnp.zeros((N, N), jnp.float32)])
    fixed = [consts["mod_02"], consts["mod_04"], consts["mod_06"]]
    step_planes = []
    for s in range(N_STEPS):
        m = STEP_MOD[s]
        if m is None:
            plane = jnp.broadcast_to(ident[None], (B_pad, 2, N, N))
        elif m % 2 == 0:                                       # learned mod_01/03/05/07
            k = m // 2
            plane = jnp.stack([lcos[k], lsin[k]], axis=1)
        else:                                                  # fixed mod_02/04/06
            f = fixed[m // 2][0, 0]
            plane = jnp.broadcast_to(
                jnp.stack([jnp.real(f), jnp.imag(f)])[None], (B_pad, 2, N, N))
        step_planes.append(plane)
    mods = jnp.stack(step_planes, axis=1)                      # (B_pad, 12, 2, N, N)
    mods = mods.reshape(B_pad, 2 * N_STEPS, N, N).astype(jnp.float32)

    # Pack: BG items stacked along sublanes (rows), BT items along lanes (cols).
    mods_packed = (mods.reshape(G, BG, BT, 2 * N_STEPS, N, N)
                   .transpose(0, 3, 1, 4, 2, 5)
                   .reshape(G, 2 * N_STEPS, H_PACK, W_PACK))

    intensity_packed = bpm_propagate(mods_packed,
                                     consts["const_planes"],
                                     consts["f_left"], consts["f_right"])   # (G, H, W)

    intensity = (intensity_packed.reshape(G, BG, N, BT, N)
                 .transpose(0, 1, 3, 2, 4)
                 .reshape(B_pad, N, N)[:B])                    # (B, N, N)

    field_out_cam = field_interpolate(intensity[:, None],
                                      size=ny_nx_bpm2cam, crop=crop_bpm2cam)
    return field_out_cam                                       # (B, 1, Ny_cam, Nx_cam) f32


# Pure-JAX reference (complex FFT) for a correctness sanity check.
def szzbpm_reference(input_img, params, consts):
    B = input_img.shape[0]
    NB = N_BPM
    learned = []
    for k in range(4):
        phase_slm = input_img * params["phase_scale"][k] + params["phase_bias"][k]
        phase_bpm = field_interpolate(phase_slm, size=ny_nx_slm2bpm, pad=pad_slm2bpm)
        learned.append(jnp.exp(1j * phase_bpm))                # (B,1,NB,NB)
    mods_c = [learned[0], consts["mod_02"], learned[1], consts["mod_04"],
              learned[2], consts["mod_06"], learned[3]]
    u0 = jnp.broadcast_to(consts["field_in"] * consts["mod_00"], (B, 1, NB, NB))
    DFR = consts["DFR_r"] + 1j * consts["DFR_i"]
    SG = consts["SG"]
    for seg in range(8):
        for _ in range(int(consts["mod_spacing"][seg])):
            u0 = jnp.fft.ifft2(jnp.fft.fft2(u0) * DFR) * SG
        if seg < 7:
            u0 = u0 * mods_c[seg]
    inten = jnp.abs(u0) ** 2
    return field_interpolate(inten.astype(jnp.float32),
                             size=ny_nx_bpm2cam, crop=crop_bpm2cam)


if __name__ == "__main__":
    params, consts = build_params_and_consts()

    batch = 2
    x_key = jax.random.PRNGKey(0)
    input_img = jax.random.uniform(x_key, (batch, 1, Ny_slm, Nx_slm),
                                   dtype=jnp.float32)          # values in [0, 1]

    out = szzbpm_forward(input_img, params, consts)
    out = jax.block_until_ready(out)
    assert out.shape == (batch, 1, Ny_cam, Nx_cam), out.shape
    assert out.dtype == jnp.float32

    # Sanity check against a pure-JAX complex-FFT reference (f32 DFT-matmul vs
    # native FFT: expected relative error ~1e-4; loose threshold for safety).
    ref = jax.block_until_ready(szzbpm_reference(input_img, params, consts))
    rel_err = float(jnp.linalg.norm(out - ref) / (jnp.linalg.norm(ref) + 1e-12))
    assert rel_err < 5e-2, f"relative error too large: {rel_err}"

    print("KERNEL_OK")
</pallas_src>

<mosaic_0001>
module attributes {stable_mosaic.version = 11 : i64} {
  func.func @_bpm_kernel(%arg0: i32, %arg1: memref<1x24x64x128xf32, #tpu.memory_space<vmem>>, %arg2: memref<5x64x128xf32, #tpu.memory_space<vmem>>, %arg3: memref<6x64x64xf32, #tpu.memory_space<vmem>>, %arg4: memref<6x128x128xf32, #tpu.memory_space<vmem>>, %arg5: memref<1x64x128xf32, #tpu.memory_space<vmem>>) attributes {dimension_semantics = [#tpu.dimension_semantics<parallel>], iteration_bounds = array<i64: 1>, scalar_prefetch = 0 : i64, scratch_operands = 0 : i64, tpu.core_type = #tpu.core_type<tc>, window_params = [{transform_indices = @transform_0, window_bounds = array<i64: 1, 24, 64, 128>}, {pipeline_mode = #tpu.pipeline_mode<synchronous>, transform_indices = @transform_1, window_bounds = array<i64: 5, 64, 128>}, {pipeline_mode = #tpu.pipeline_mode<synchronous>, transform_indices = @transform_2, window_bounds = array<i64: 6, 64, 64>}, {pipeline_mode = #tpu.pipeline_mode<synchronous>, transform_indices = @transform_3, window_bounds = array<i64: 6, 128, 128>}, {transform_indices = @transform_4, window_bounds = array<i64: 1, 64, 128>}]} {
    %c0 = arith.constant 0 : index
    %c0_0 = arith.constant 0 : index
    %c0_1 = arith.constant 0 : index
    %0 = vector.load %arg2[%c0, %c0_0, %c0_1] : memref<5x64x128xf32, #tpu.memory_space<vmem>>, vector<1x64x128xf32>
    %1 = vector.shape_cast %0 : vector<1x64x128xf32> to vector<64x128xf32>
    %c1 = arith.constant 1 : index
    %c0_2 = arith.constant 0 : index
    %c0_3 = arith.constant 0 : index
    %2 = vector.load %arg2[%c1, %c0_2, %c0_3] : memref<5x64x128xf32, #tpu.memory_space<vmem>>, vector<1x64x128xf32>
    %3 = vector.shape_cast %2 : vector<1x64x128xf32> to vector<64x128xf32>
    %c0_i32 = arith.constant 0 : i32
    %c12_i32 = arith.constant 12 : i32
    %4 = arith.addi %c0_i32, %c12_i32 : i32
    %c1_i32 = arith.constant 1 : i32
    %5:2 = scf.for %arg6 = %c0_i32 to %4 step %c1_i32 iter_args(%arg7 = %1, %arg8 = %3) -> (vector<64x128xf32>, vector<64x128xf32>)  : i32 {
      %c0_8 = arith.constant 0 : index
      %c0_9 = arith.constant 0 : index
      %c0_10 = arith.constant 0 : index
      %12 = vector.load %arg3[%c0_8, %c0_9, %c0_10] : memref<6x64x64xf32, #tpu.memory_space<vmem>>, vector<1x64x64xf32>
      %13 = vector.shape_cast %12 : vector<1x64x64xf32> to vector<64x64xf32>
      %cst = arith.constant dense<0.000000e+00> : vector<64x128xf32>
      %14 = tpu.matmul %13, %arg7, %cst {dimension_numbers = #tpu.dot_dimension_numbers<[1], [0], [0], [1], [0, 0, 1, 1], [], []>} : vector<64x64xf32>, vector<64x128xf32>, vector<64x128xf32> -> vector<64x128xf32>
      %c1_11 = arith.constant 1 : index
      %c0_12 = arith.constant 0 : index
      %c0_13 = arith.constant 0 : index
      %15 = vector.load %arg3[%c1_11, %c0_12, %c0_13] : memref<6x64x64xf32, #tpu.memory_space<vmem>>, vector<1x64x64xf32>
      %16 = vector.shape_cast %15 : vector<1x64x64xf32> to vector<64x64xf32>
      %cst_14 = arith.constant dense<0.000000e+00> : vector<64x128xf32>
      %17 = tpu.matmul %16, %arg8, %cst_14 {dimension_numbers = #tpu.dot_dimension_numbers<[1], [0], [0], [1], [0, 0, 1, 1], [], []>} : vector<64x64xf32>, vector<64x128xf32>, vector<64x128xf32> -> vector<64x128xf32>
      %c2 = arith.constant 2 : index
      %c0_15 = arith.constant 0 : index
      %c0_16 = arith.constant 0 : index
      %18 = vector.load %arg3[%c2, %c0_15, %c0_16] : memref<6x64x64xf32, #tpu.memory_space<vmem>>, vector<1x64x64xf32>
      %19 = vector.shape_cast %18 : vector<1x64x64xf32> to vector<64x64xf32>
      %20 = arith.addf %arg7, %arg8 : vector<64x128xf32>
      %cst_17 = arith.constant dense<0.000000e+00> : vector<64x128xf32>
      %21 = tpu.matmul %19, %20, %cst_17 {dimension_numbers = #tpu.dot_dimension_numbers<[1], [0], [0], [1], [0, 0, 1, 1], [], []>} : vector<64x64xf32>, vector<64x128xf32>, vector<64x128xf32> -> vector<64x128xf32>
      %22 = arith.subf %14, %17 : vector<64x128xf32>
      %23 = arith.subf %21, %14 : vector<64x128xf32>
      %24 = arith.subf %23, %17 : vector<64x128xf32>
      %c0_18 = arith.constant 0 : index
      %c0_19 = arith.constant 0 : index
      %c0_20 = arith.constant 0 : index
      %25 = vector.load %arg4[%c0_18, %c0_19, %c0_20] : memref<6x128x128xf32, #tpu.memory_space<vmem>>, vector<1x128x128xf32>
      %26 = vector.shape_cast %25 : vector<1x128x128xf32> to vector<128x128xf32>
      %cst_21 = arith.constant dense<0.000000e+00> : vector<64x128xf32>
      %27 = tpu.matmul %22, %26, %cst_21 {dimension_numbers = #tpu.dot_dimension_numbers<[1], [0], [0], [1], [0, 0, 1, 1], [], []>} : vector<64x128xf32>, vector<128x128xf32>, vector<64x128xf32> -> vector<64x128xf32>
      %c1_22 = arith.constant 1 : index
      %c0_23 = arith.constant 0 : index
      %c0_24 = arith.constant 0 : index
      %28 = vector.load %arg4[%c1_22, %c0_23, %c0_24] : memref<6x128x128xf32, #tpu.memory_space<vmem>>, vector<1x128x128xf32>
      %29 = vector.shape_cast %28 : vector<1x128x128xf32> to vector<128x128xf32>
      %cst_25 = arith.constant dense<0.000000e+00> : vector<64x128xf32>
      %30 = tpu.matmul %24, %29, %cst_25 {dimension_numbers = #tpu.dot_dimension_numbers<[1], [0], [0], [1], [0, 0, 1, 1], [], []>} : vector<64x128xf32>, vector<128x128xf32>, vector<64x128xf32> -> vector<64x128xf32>
      %31 = arith.addf %22, %24 : vector<64x128xf32>
      %c2_26 = arith.constant 2 : index
      %c0_27 = arith.constant 0 : index
      %c0_28 = arith.constant 0 : index
      %32 = vector.load %arg4[%c2_26, %c0_27, %c0_28] : memref<6x128x128xf32, #tpu.memory_space<vmem>>, vector<1x128x128xf32>
      %33 = vector.shape_cast %32 : vector<1x128x128xf32> to vector<128x128xf32>
      %cst_29 = arith.constant dense<0.000000e+00> : vector<64x128xf32>
      %34 = tpu.matmul %31, %33, %cst_29 {dimension_numbers = #tpu.dot_dimension_numbers<[1], [0], [0], [1], [0, 0, 1, 1], [], []>} : vector<64x128xf32>, vector<128x128xf32>, vector<64x128xf32> -> vector<64x128xf32>
      %35 = arith.subf %27, %30 : vector<64x128xf32>
      %36 = arith.subf %34, %27 : vector<64x128xf32>
      %37 = arith.subf %36, %30 : vector<64x128xf32>
      %c2_30 = arith.constant 2 : index
      %c0_31 = arith.constant 0 : index
      %c0_32 = arith.constant 0 : index
      %38 = vector.load %arg2[%c2_30, %c0_31, %c0_32] : memref<5x64x128xf32, #tpu.memory_space<vmem>>, vector<1x64x128xf32>
      %39 = vector.shape_cast %38 : vector<1x64x128xf32> to vector<64x128xf32>
      %c3 = arith.constant 3 : index
      %c0_33 = arith.constant 0 : index
      %c0_34 = arith.constant 0 : index
      %40 = vector.load %arg2[%c3, %c0_33, %c0_34] : memref<5x64x128xf32, #tpu.memory_space<vmem>>, vector<1x64x128xf32>
      %41 = vector.shape_cast %40 : vector<1x64x128xf32> to vector<64x128xf32>
      %42 = arith.mulf %35, %39 : vector<64x128xf32>
      %43 = arith.mulf %37, %41 : vector<64x128xf32>
      %44 = arith.subf %42, %43 : vector<64x128xf32>
      %45 = arith.mulf %35, %41 : vector<64x128xf32>
      %46 = arith.mulf %37, %39 : vector<64x128xf32>
      %47 = arith.addf %45, %46 : vector<64x128xf32>
      %c3_35 = arith.constant 3 : index
      %c0_36 = arith.constant 0 : index
      %c0_37 = arith.constant 0 : index
      %48 = vector.load %arg3[%c3_35, %c0_36, %c0_37] : memref<6x64x64xf32, #tpu.memory_space<vmem>>, vector<1x64x64xf32>
      %49 = vector.shape_cast %48 : vector<1x64x64xf32> to vector<64x64xf32>
      %cst_38 = arith.constant dense<0.000000e+00> : vector<64x128xf32>
      %50 = tpu.matmul %49, %44, %cst_38 {dimension_numbers = #tpu.dot_dimension_numbers<[1], [0], [0], [1], [0, 0, 1, 1], [], []>} : vector<64x64xf32>, vector<64x128xf32>, vector<64x128xf32> -> vector<64x128xf32>
      %c4 = arith.constant 4 : index
      %c0_39 = arith.constant 0 : index
      %c0_40 = arith.constant 0 : index
      %51 = vector.load %arg3[%c4, %c0_39, %c0_40] : memref<6x64x64xf32, #tpu.memory_space<vmem>>, vector<1x64x64xf32>
      %52 = vector.shape_cast %51 : vector<1x64x64xf32> to vector<64x64xf32>
      %cst_41 = arith.constant dense<0.000000e+00> : vector<64x128xf32>
      %53 = tpu.matmul %52, %47, %cst_41 {dimension_numbers = #tpu.dot_dimension_numbers<[1], [0], [0], [1], [0, 0, 1, 1], [], []>} : vector<64x64xf32>, vector<64x128xf32>, vector<64x128xf32> -> vector<64x128xf32>
      %c5 = arith.constant 5 : index
      %c0_42 = arith.constant 0 : index
      %c0_43 = arith.constant 0 : index
      %54 = vector.load %arg3[%c5, %c0_42, %c0_43] : memref<6x64x64xf32, #tpu.memory_space<vmem>>, vector<1x64x64xf32>
      %55 = vector.shape_cast %54 : vector<1x64x64xf32> to vector<64x64xf32>
      %56 = arith.addf %44, %47 : vector<64x128xf32>
      %cst_44 = arith.constant dense<0.000000e+00> : vector<64x128xf32>
      %57 = tpu.matmul %55, %56, %cst_44 {dimension_numbers = #tpu.dot_dimension_numbers<[1], [0], [0], [1], [0, 0, 1, 1], [], []>} : vector<64x64xf32>, vector<64x128xf32>, vector<64x128xf32> -> vector<64x128xf32>
      %58 = arith.subf %50, %53 : vector<64x128xf32>
      %59 = arith.subf %57, %50 : vector<64x128xf32>
      %60 = arith.subf %59, %53 : vector<64x128xf32>
      %c3_45 = arith.constant 3 : index
      %c0_46 = arith.constant 0 : index
      %c0_47 = arith.constant 0 : index
      %61 = vector.load %arg4[%c3_45, %c0_46, %c0_47] : memref<6x128x128xf32, #tpu.memory_space<vmem>>, vector<1x128x128xf32>
      %62 = vector.shape_cast %61 : vector<1x128x128xf32> to vector<128x128xf32>
      %cst_48 = arith.constant dense<0.000000e+00> : vector<64x128xf32>
      %63 = tpu.matmul %58, %62, %cst_48 {dimension_numbers = #tpu.dot_dimension_numbers<[1], [0], [0], [1], [0, 0, 1, 1], [], []>} : vector<64x128xf32>, vector<128x128xf32>, vector<64x128xf32> -> vector<64x128xf32>
      %c4_49 = arith.constant 4 : index
      %c0_50 = arith.constant 0 : index
      %c0_51 = arith.constant 0 : index
      %64 = vector.load %arg4[%c4_49, %c0_50, %c0_51] : memref<6x128x128xf32, #tpu.memory_space<vmem>>, vector<1x128x128xf32>
      %65 = vector.shape_cast %64 : vector<1x128x128xf32> to vector<128x128xf32>
      %cst_52 = arith.constant dense<0.000000e+00> : vector<64x128xf32>
      %66 = tpu.matmul %60, %65, %cst_52 {dimension_numbers = #tpu.dot_dimension_numbers<[1], [0], [0], [1], [0, 0, 1, 1], [], []>} : vector<64x128xf32>, vector<128x128xf32>, vector<64x128xf32> -> vector<64x128xf32>
      %67 = arith.addf %58, %60 : vector<64x128xf32>
      %c5_53 = arith.constant 5 : index
      %c0_54 = arith.constant 0 : index
      %c0_55 = arith.constant 0 : index
      %68 = vector.load %arg4[%c5_53, %c0_54, %c0_55] : memref<6x128x128xf32, #tpu.memory_space<vmem>>, vector<1x128x128xf32>
      %69 = vector.shape_cast %68 : vector<1x128x128xf32> to vector<128x128xf32>
      %cst_56 = arith.constant dense<0.000000e+00> : vector<64x128xf32>
      %70 = tpu.matmul %67, %69, %cst_56 {dimension_numbers = #tpu.dot_dimension_numbers<[1], [0], [0], [1], [0, 0, 1, 1], [], []>} : vector<64x128xf32>, vector<128x128xf32>, vector<64x128xf32> -> vector<64x128xf32>
      %71 = arith.subf %63, %66 : vector<64x128xf32>
      %72 = arith.subf %70, %63 : vector<64x128xf32>
      %73 = arith.subf %72, %66 : vector<64x128xf32>
      %c4_57 = arith.constant 4 : index
      %c0_58 = arith.constant 0 : index
      %c0_59 = arith.constant 0 : index
      %74 = vector.load %arg2[%c4_57, %c0_58, %c0_59] : memref<5x64x128xf32, #tpu.memory_space<vmem>>, vector<1x64x128xf32>
      %75 = vector.shape_cast %74 : vector<1x64x128xf32> to vector<64x128xf32>
      %76 = arith.mulf %71, %75 : vector<64x128xf32>
      %77 = arith.mulf %73, %75 : vector<64x128xf32>
      %c2_i32 = arith.constant 2 : i32
      %78 = arith.muli %c2_i32, %arg6 : i32
      %c0_60 = arith.constant 0 : index
      %79 = arith.index_cast %78 : i32 to index
      %c0_61 = arith.constant 0 : index
      %c0_62 = arith.constant 0 : index
      %80 = vector.load %arg1[%c0_60, %79, %c0_61, %c0_62] : memref<1x24x64x128xf32, #tpu.memory_space<vmem>>, vector<1x1x64x128xf32>
      %81 = vector.shape_cast %80 : vector<1x1x64x128xf32> to vector<64x128xf32>
      %c2_i32_63 = arith.constant 2 : i32
      %82 = arith.muli %c2_i32_63, %arg6 : i32
      %c1_i32_64 = arith.constant 1 : i32
      %83 = arith.addi %82, %c1_i32_64 : i32
      %c0_65 = arith.constant 0 : index
      %84 = arith.index_cast %83 : i32 to index
      %c0_66 = arith.constant 0 : index
      %c0_67 = arith.constant 0 : index
      %85 = vector.load %arg1[%c0_65, %84, %c0_66, %c0_67] : memref<1x24x64x128xf32, #tpu.memory_space<vmem>>, vector<1x1x64x128xf32>
      %86 = vector.shape_cast %85 : vector<1x1x64x128xf32> to vector<64x128xf32>
      %87 = arith.mulf %76, %81 : vector<64x128xf32>
      %88 = arith.mulf %77, %86 : vector<64x128xf32>
      %89 = arith.subf %87, %88 : vector<64x128xf32>
      %90 = arith.mulf %76, %86 : vector<64x128xf32>
      %91 = arith.mulf %77, %81 : vector<64x128xf32>
      %92 = arith.addf %90, %91 : vector<64x128xf32>
      scf.yield %89, %92 : vector<64x128xf32>, vector<64x128xf32>
    }
    %c12_i32_4 = arith.constant 12 : i32
    %6 = arith.mulf %5#0, %5#0 : vector<64x128xf32>
    %7 = arith.mulf %5#1, %5#1 : vector<64x128xf32>
    %8 = arith.addf %6, %7 : vector<64x128xf32>
    %c0_5 = arith.constant 0 : index
    %c0_6 = arith.constant 0 : index
    %c0_7 = arith.constant 0 : index
    %9 = vector.load %arg5[%c0_5, %c0_6, %c0_7] : memref<1x64x128xf32, #tpu.memory_space<vmem>>, vector<1x64x128xf32>
    %10 = vector.shape_cast %9 : vector<1x64x128xf32> to vector<64x128xf32>
    %11 = vector.shape_cast %8 : vector<64x128xf32> to vector<1x64x128xf32>
    tpu.vector_store %arg5[%c0_5, %c0_6, %c0_7], %11 {strides = array<i32>} : memref<1x64x128xf32, #tpu.memory_space<vmem>>, vector<1x64x128xf32>,
    return
  }
  func.func @transform_0(%arg0: i32) -> (i32, i32, i32, i32) {
    %c0_i32 = arith.constant 0 : i32
    %c0_i32_0 = arith.constant 0 : i32
    %c0_i32_1 = arith.constant 0 : i32
    %c0_i32_2 = arith.constant 0 : i32
    return %arg0, %c0_i32, %c0_i32_0, %c0_i32_1 : i32, i32, i32, i32
  }
  func.func @transform_1(%arg0: i32) -> (i32, i32, i32) {
    %c0_i32 = arith.constant 0 : i32
    %c0_i32_0 = arith.constant 0 : i32
    %c0_i32_1 = arith.constant 0 : i32
    %c0_i32_2 = arith.constant 0 : i32
    return %c0_i32, %c0_i32_0, %c0_i32_1 : i32, i32, i32
  }
  func.func @transform_2(%arg0: i32) -> (i32, i32, i32) {
    %c0_i32 = arith.constant 0 : i32
    %c0_i32_0 = arith.constant 0 : i32
    %c0_i32_1 = arith.constant 0 : i32
    %c0_i32_2 = arith.constant 0 : i32
    return %c0_i32, %c0_i32_0, %c0_i32_1 : i32, i32, i32
  }
  func.func @transform_3(%arg0: i32) -> (i32, i32, i32) {
    %c0_i32 = arith.constant 0 : i32
    %c0_i32_0 = arith.constant 0 : i32
    %c0_i32_1 = arith.constant 0 : i32
    %c0_i32_2 = arith.constant 0 : i32
    return %c0_i32, %c0_i32_0, %c0_i32_1 : i32, i32, i32
  }
  func.func @transform_4(%arg0: i32) -> (i32, i32, i32) {
    %c0_i32 = arith.constant 0 : i32
    %c0_i32_0 = arith.constant 0 : i32
    %c0_i32_1 = arith.constant 0 : i32
    return %arg0, %c0_i32, %c0_i32_0 : i32, i32, i32
  }
}

</mosaic_0001>

<llo_original>
// kernel: tpu_custom_call.1
$region0: #{tpu_custom_call.1}
  #allocation0 [shape = 'u32[]', space=smem, size = 0x4, offset = 0x4, fixed_abs, tag = 'smem constant byte address 0x4 - core index']
  #allocation1 [shape = 'u32[144,128]{1,0:T(1,128)}', space=vmem, size = 0x12000, scoped, tag = 'internal scratch']
  %s0 = inlined_call_operand.hbm [shape: f32[1,24,64,128], index: 0, kind: input, shape index: {}]
  %s1 = inlined_call_operand.hbm [shape: f32[5,64,128], index: 1, kind: input, shape index: {}]
  %s2 = inlined_call_operand.hbm [shape: f32[6,64,64], index: 2, kind: input, shape index: {}]
  %s3 = inlined_call_operand.hbm [shape: f32[6,128,128], index: 3, kind: input, shape index: {}]
  %s4 = inlined_call_operand.hbm [shape: f32[1,64,128], index: 4, kind: output, shape index: {}]
  %s5 = sld [smem:[#allocation0]]
  $region49: #{tpu_custom_call.1} parent=0
    _
  %s7 = ssub.s32 1, %s5
  %s8 = scalar_select 0, %s7, %s5
  $region1: #{tpu_custom_call.1} parent=0
    #allocation2 [shape = 'u8[786432]{0}', space=vmem, size = 0xc0000, scoped, tag = 'input window, operand 0, single buffered']
    #allocation3 [shape = 's32[1]{0}', space=sflag, size = 0x4, scoped, tag = 'scoped memory for tpu_custom_call.1']
    #allocation4 [shape = 's32[1]{0}', space=sflag, size = 0x4, scoped, tag = 'scoped memory for tpu_custom_call.1']
    #allocation5 [shape = 'u8[163840]{0}', space=vmem, size = 0x28000, scoped, tag = 'input window, operand 1, single buffered']
    #allocation6 [shape = 's32[1]{0}', space=sflag, size = 0x4, scoped, tag = 'scoped memory for tpu_custom_call.1']
    #allocation7 [shape = 'u8[196608]{0}', space=vmem, size = 0x30000, scoped, tag = 'input window, operand 2, single buffered']
    #allocation8 [shape = 'u8[393216]{0}', space=vmem, size = 0x60000, scoped, tag = 'input window, operand 3, single buffered']
    #allocation9 [shape = 's32[1]{0}', space=sflag, size = 0x4, scoped, tag = 'scoped memory for tpu_custom_call.1']
    #allocation10 [shape = 'u8[32768]{0}', space=vmem, size = 0x8000, scoped, tag = 'output window, operand 0, single buffered']
    %9 = vsyncpa [#allocation3], 0
    %10 = vsyncpa [#allocation6], 0
    %11 = vsyncpa [#allocation9], 0
    %12 = vsyncpa [#allocation4], 0
    // Predicated region
    $region2: #{tpu_custom_call.1} parent=1 // pred_check
      _
    $region3: #{tpu_custom_call.1} parent=1 // pred_check_branch
      %14 = sbr.rel (0) target = $region5
    $region4: #{tpu_custom_call.1} parent=1 // pred_region
      %s16 = ssub.s32 24576, 24576
      %17 = vsyncadd [#allocation3], %s16
      %s18 = sshll.u32 [#allocation2], 4
      %s19 = int_to_ptr.vmem [resolvable:$true] %s18
      %24 = dma.hbm_to_vmem [thread:$0]  %s0, 24576, %s19, [#allocation3], 128, 128, 8
    $region5: #{tpu_custom_call.1} parent=1 // pred_fallthru
      _
    // Predicated region
    $region6: #{tpu_custom_call.1} parent=1 // pred_check
      _
    $region7: #{tpu_custom_call.1} parent=1 // pred_check_branch
      %26 = sbr.rel (0) target = $region9
    $region8: #{tpu_custom_call.1} parent=1 // pred_region
      %s28 = ssub.s32 5120, 5120
      %29 = vsyncadd [#allocation6], %s28
      %s30 = sshll.u32 [#allocation5], 4
      %s31 = int_to_ptr.vmem [resolvable:$true] %s30
      %36 = dma.hbm_to_vmem [thread:$0]  %s1, 5120, %s31, [#allocation6], 128, 128, 8
    $region9: #{tpu_custom_call.1} parent=1 // pred_fallthru
      _
    // Predicated region
    $region10: #{tpu_custom_call.1} parent=1 // pred_check
      _
    $region11: #{tpu_custom_call.1} parent=1 // pred_check_branch
      %38 = sbr.rel (0) target = $region13
    $region12: #{tpu_custom_call.1} parent=1 // pred_region
      %s40 = ssub.s32 6144, 6144
      %41 = vsyncadd [#allocation6], %s40
      %s42 = sshll.u32 [#allocation7], 4
      %s43 = int_to_ptr.vmem [resolvable:$true] %s42
      %48 = dma.hbm_to_vmem [thread:$0]  %s2, 6144, %s43, [#allocation6], 128, 128, 8
    $region13: #{tpu_custom_call.1} parent=1 // pred_fallthru
      _
    // Predicated region
    $region14: #{tpu_custom_call.1} parent=1 // pred_check
      _
    $region15: #{tpu_custom_call.1} parent=1 // pred_check_branch
      %50 = sbr.rel (0) target = $region17
    $region16: #{tpu_custom_call.1} parent=1 // pred_region
      %s52 = ssub.s32 12288, 12288
      %53 = vsyncadd [#allocation9], %s52
      %s54 = sshll.u32 [#allocation8], 4
      %s55 = int_to_ptr.vmem [resolvable:$true] %s54
      %60 = dma.hbm_to_vmem [thread:$0]  %s3, 12288, %s55, [#allocation9], 128, 128, 8
    $region17: #{tpu_custom_call.1} parent=1 // pred_fallthru
      _
    // Predicated region
    $region18: #{tpu_custom_call.1} parent=1 // pred_check
      _
    $region19: #{tpu_custom_call.1} parent=1 // pred_check_branch
      %62 = sbr.rel (0) target = $region21
    $region20: #{tpu_custom_call.1} parent=1 // pred_region
      %63 = dma.done [#allocation3], 24576
    $region21: #{tpu_custom_call.1} parent=1 // pred_fallthru
      _
    // Predicated region
    $region22: #{tpu_custom_call.1} parent=1 // pred_check
      _
    $region23: #{tpu_custom_call.1} parent=1 // pred_check_branch
      %65 = sbr.rel (0) target = $region25
    $region24: #{tpu_custom_call.1} parent=1 // pred_region
      %66 = dma.done [#allocation6], 5120
    $region25: #{tpu_custom_call.1} parent=1 // pred_fallthru
      _
    // Predicated region
    $region26: #{tpu_custom_call.1} parent=1 // pred_check
      _
    $region27: #{tpu_custom_call.1} parent=1 // pred_check_branch
      %68 = sbr.rel (0) target = $region29
    $region28: #{tpu_custom_call.1} parent=1 // pred_region
      %69 = dma.done [#allocation6], 6144
    $region29: #{tpu_custom_call.1} parent=1 // pred_fallthru
      _
    // Predicated region
    $region30: #{tpu_custom_call.1} parent=1 // pred_check
      _
    $region31: #{tpu_custom_call.1} parent=1 // pred_check_branch
      %71 = sbr.rel (0) target = $region33
    $region32: #{tpu_custom_call.1} parent=1 // pred_region
      %72 = dma.done [#allocation9], 12288
    $region33: #{tpu_custom_call.1} parent=1 // pred_fallthru
      _
    %v73 = vld [vmem:[#allocation5] sm:$0xff]
    %v74 = vld [vmem:[#allocation5 + $0x8] sm:$0xff]
    %v75 = vld [vmem:[#allocation5 + $0x10] sm:$0xff]
    %v76 = vld [vmem:[#allocation5 + $0x18] sm:$0xff]
    %v77 = vld [vmem:[#allocation5 + $0x20] sm:$0xff]
    %v78 = vld [vmem:[#allocation5 + $0x28] sm:$0xff]
    %v79 = vld [vmem:[#allocation5 + $0x30] sm:$0xff]
    %v80 = vld [vmem:[#allocation5 + $0x38] sm:$0xff]
    %s81 = scalar_lea.vmem [#allocation5], 64
    %v82 = vld [vmem:[%s81] sm:$0xff]
    %v83 = vld [vmem:[%s81 + $0x8] sm:$0xff]
    %v84 = vld [vmem:[%s81 + $0x10] sm:$0xff]
    %v85 = vld [vmem:[%s81 + $0x18] sm:$0xff]
    %v86 = vld [vmem:[%s81 + $0x20] sm:$0xff]
    %v87 = vld [vmem:[%s81 + $0x28] sm:$0xff]
    %v88 = vld [vmem:[%s81 + $0x30] sm:$0xff]
    %v89 = vld [vmem:[%s81 + $0x38] sm:$0xff]
    loop: start=0, step=1, limit=12
    $region34: #{tpu_custom_call.1} parent=1 // loop_pre_header
      _
    $region35: #{tpu_custom_call.1} parent=1 // loop_header
      %s91 = sphi 0, %s95
      %p92 = scmp.ge.s32.totalorder %s91, 12
      %v96 = vphi %v73, %v1928
      %v97 = vphi %v74, %v1929
      %v98 = vphi %v75, %v1930
      %v99 = vphi %v76, %v1931
      %v100 = vphi %v77, %v1932
      %v101 = vphi %v78, %v1933
      %v102 = vphi %v79, %v1934
      %v103 = vphi %v80, %v1935
      %v104 = vphi %v82, %v1952
      %v105 = vphi %v83, %v1953
      %v106 = vphi %v84, %v1954
      %v107 = vphi %v85, %v1955
      %v108 = vphi %v86, %v1956
      %v109 = vphi %v87, %v1957
      %v110 = vphi %v88, %v1958
      %v111 = vphi %v89, %v1959
    $region36: #{tpu_custom_call.1} parent=1 // loop_header_branch
      %94 = sbr.rel (%p92) target = $region40
    $region37: #{tpu_custom_call.1} parent=1 // loop_body
      %v112 = vld [vmem:[#allocation7] sm:$0xff]
      %v113 = vld [vmem:[#allocation7 + $0x8] sm:$0xff]
      %v114 = vld [vmem:[#allocation7 + $0x10] sm:$0xff]
      %v115 = vld [vmem:[#allocation7 + $0x18] sm:$0xff]
      %v116 = vld [vmem:[#allocation7 + $0x20] sm:$0xff]
      %v117 = vld [vmem:[#allocation7 + $0x28] sm:$0xff]
      %v118 = vld [vmem:[#allocation7 + $0x30] sm:$0xff]
      %v119 = vld [vmem:[#allocation7 + $0x38] sm:$0xff]
      %vm120 = vcmask 523264
      %v122 = vsel %vm120, %v112, 0
      %v125 = vsel %vm120, %v113, 0
      %v128 = vsel %vm120, %v114, 0
      %v131 = vsel %vm120, %v115, 0
      %v134 = vsel %vm120, %v116, 0
      %v137 = vsel %vm120, %v117, 0
      %v140 = vsel %vm120, %v118, 0
      %v143 = vsel %vm120, %v119, 0
      %145 = vmatprep.subr.mxu0 0.0
      %146 = vmatpush1.msra.mxu0 0.0
      %147 = vmatprep.subr.mxu0 0.0
      %148 = vmatpush1.msra.mxu0 0.0
      %149 = vmatprep.subr.mxu0 0.0
      %150 = vmatpush1.msra.mxu0 0.0
      %151 = vmatprep.subr.mxu0 0.0
      %152 = vmatpush1.msra.mxu0 0.0
      %153 = vmatprep.subr.mxu0 0.0
      %154 = vmatpush1.msra.mxu0 0.0
      %155 = vmatprep.subr.mxu0 0.0
      %156 = vmatpush1.msra.mxu0 0.0
      %157 = vmatprep.subr.mxu0 0.0
      %158 = vmatpush1.msra.mxu0 0.0
      %159 = vmatprep.subr.mxu0 0.0
      %160 = vmatpush1.msra.mxu0 0.0
      %161 = vmatprep.subr.mxu0 0.0
      %162 = vmatpush1.msra.mxu0 %v103
      %163 = vmatprep.subr.mxu0 0.0
      %164 = vmatpush1.msra.mxu0 %v102
      %165 = vmatprep.subr.mxu0 0.0
      %166 = vmatpush1.msra.mxu0 %v101
      %167 = vmatprep.subr.mxu0 0.0
      %168 = vmatpush1.msra.mxu0 %v100
      %169 = vmatprep.subr.mxu0 0.0
      %170 = vmatpush1.msra.mxu0 %v99
      %171 = vmatprep.subr.mxu0 0.0
      %172 = vmatpush1.msra.mxu0 %v98
      %173 = vmatprep.subr.mxu0 0.0
      %174 = vmatpush1.msra.mxu0 %v97
      %175 = vmatprep.subr.mxu0 0.0
      %176 = vmatpush1.msra.mxu0 %v96
      %177 = vmatprep.subr.mxu0 0.0
      %178 = vmatpush2.msra.mxu0 0.0
      %179 = vmatprep.subr.mxu0 0.0
      %180 = vmatpush2.msra.mxu0 0.0
      %181 = vmatprep.subr.mxu0 0.0
      %182 = vmatpush2.msra.mxu0 0.0
      %183 = vmatprep.subr.mxu0 0.0
      %184 = vmatpush2.msra.mxu0 0.0
      %185 = vmatprep.subr.mxu0 0.0
      %186 = vmatpush2.msra.mxu0 0.0
      %187 = vmatprep.subr.mxu0 0.0
      %188 = vmatpush2.msra.mxu0 0.0
      %189 = vmatprep.subr.mxu0 0.0
      %190 = vmatpush2.msra.mxu0 0.0
      %191 = vmatprep.subr.mxu0 0.0
      %192 = vmatpush2.msra.mxu0 0.0
      %193 = vmatprep.subr.mxu0 0.0
      %194 = vmatpush2.msra.mxu0 0.0
      %195 = vmatprep.subr.mxu0 0.0
      %196 = vmatpush2.msra.mxu0 0.0
      %197 = vmatprep.subr.mxu0 0.0
      %198 = vmatpush2.msra.mxu0 0.0
      %199 = vmatprep.subr.mxu0 0.0
      %200 = vmatpush2.msra.mxu0 0.0
      %201 = vmatprep.subr.mxu0 0.0
      %202 = vmatpush2.msra.mxu0 0.0
      %203 = vmatprep.subr.mxu0 0.0
      %204 = vmatpush2.msra.mxu0 0.0
      %205 = vmatprep.subr.mxu0 0.0
      %206 = vmatpush2.msra.mxu0 0.0
      %207 = vmatprep.subr.mxu0 0.0
      %208 = vmatpush2.msra.mxu0 0.0
      %209 = vmatprep.mubr.f32.mxu0 0.0
      %210 = vmatmul.mubr.f32.gmra.mxu0 %v122
      %v211 = vpop.f32.mrf.mxu0
      %v212 = vadd.f32 0.0, %v211
      %v213 = vpop.f32.mrf.mxu0
      %214 = vmatprep.mubr.f32.mxu0 0.0
      %215 = vmatmul.mubr.f32.gmra.mxu0 %v125
      %v216 = vpop.f32.mrf.mxu0
      %v217 = vadd.f32 0.0, %v216
      %v218 = vpop.f32.mrf.mxu0
      %219 = vmatprep.mubr.f32.mxu0 0.0
      %220 = vmatmul.mubr.f32.gmra.mxu0 %v128
      %v221 = vpop.f32.mrf.mxu0
      %v222 = vadd.f32 0.0, %v221
      %v223 = vpop.f32.mrf.mxu0
      %224 = vmatprep.mubr.f32.mxu0 0.0
      %225 = vmatmul.mubr.f32.gmra.mxu0 %v131
      %v226 = vpop.f32.mrf.mxu0
      %v227 = vadd.f32 0.0, %v226
      %v228 = vpop.f32.mrf.mxu0
      %229 = vmatprep.mubr.f32.mxu0 0.0
      %230 = vmatmul.mubr.f32.gmra.mxu0 %v134
      %v231 = vpop.f32.mrf.mxu0
      %v232 = vadd.f32 0.0, %v231
      %v233 = vpop.f32.mrf.mxu0
      %234 = vmatprep.mubr.f32.mxu0 0.0
      %235 = vmatmul.mubr.f32.gmra.mxu0 %v137
      %v236 = vpop.f32.mrf.mxu0
      %v237 = vadd.f32 0.0, %v236
      %v238 = vpop.f32.mrf.mxu0
      %239 = vmatprep.mubr.f32.mxu0 0.0
      %240 = vmatmul.mubr.f32.gmra.mxu0 %v140
      %v241 = vpop.f32.mrf.mxu0
      %v242 = vadd.f32 0.0, %v241
      %v243 = vpop.f32.mrf.mxu0
      %244 = vmatprep.mubr.f32.mxu0 0.0
      %245 = vmatmul.mubr.f32.gmra.mxu0 %v143
      %v246 = vpop.f32.mrf.mxu0
      %v247 = vadd.f32 0.0, %v246
      %v248 = vpop.f32.mrf.mxu0
      %249 = vdwg.mxu0
      %s250 = scalar_lea.vmem [#allocation7], 64
      %v251 = vld [vmem:[%s250] sm:$0xff]
      %v252 = vld [vmem:[%s250 + $0x8] sm:$0xff]
      %v253 = vld [vmem:[%s250 + $0x10] sm:$0xff]
      %v254 = vld [vmem:[%s250 + $0x18] sm:$0xff]
      %v255 = vld [vmem:[%s250 + $0x20] sm:$0xff]
      %v256 = vld [vmem:[%s250 + $0x28] sm:$0xff]
      %v257 = vld [vmem:[%s250 + $0x30] sm:$0xff]
      %v258 = vld [vmem:[%s250 + $0x38] sm:$0xff]
      %v260 = vsel %vm120, %v251, 0
      %v263 = vsel %vm120, %v252, 0
      %v266 = vsel %vm120, %v253, 0
      %v269 = vsel %vm120, %v254, 0
      %v272 = vsel %vm120, %v255, 0
      %v275 = vsel %vm120, %v256, 0
      %v278 = vsel %vm120, %v257, 0
      %v281 = vsel %vm120, %v258, 0
      %283 = vmatprep.subr.mxu0 0.0
      %284 = vmatpush1.msra.mxu0 0.0
      %285 = vmatprep.subr.mxu0 0.0
      %286 = vmatpush1.msra.mxu0 0.0
      %287 = vmatprep.subr.mxu0 0.0
      %288 = vmatpush1.msra.mxu0 0.0
      %289 = vmatprep.subr.mxu0 0.0
      %290 = vmatpush1.msra.mxu0 0.0
      %291 = vmatprep.subr.mxu0 0.0
      %292 = vmatpush1.msra.mxu0 0.0
      %293 = vmatprep.subr.mxu0 0.0
      %294 = vmatpush1.msra.mxu0 0.0
      %295 = vmatprep.subr.mxu0 0.0
      %296 = vmatpush1.msra.mxu0 0.0
      %297 = vmatprep.subr.mxu0 0.0
      %298 = vmatpush1.msra.mxu0 0.0
      %299 = vmatprep.subr.mxu0 0.0
      %300 = vmatpush1.msra.mxu0 %v111
      %301 = vmatprep.subr.mxu0 0.0
      %302 = vmatpush1.msra.mxu0 %v110
      %303 = vmatprep.subr.mxu0 0.0
      %304 = vmatpush1.msra.mxu0 %v109
      %305 = vmatprep.subr.mxu0 0.0
      %306 = vmatpush1.msra.mxu0 %v108
      %307 = vmatprep.subr.mxu0 0.0
      %308 = vmatpush1.msra.mxu0 %v107
      %309 = vmatprep.subr.mxu0 0.0
      %310 = vmatpush1.msra.mxu0 %v106
      %311 = vmatprep.subr.mxu0 0.0
      %312 = vmatpush1.msra.mxu0 %v105
      %313 = vmatprep.subr.mxu0 0.0
      %314 = vmatpush1.msra.mxu0 %v104
      %315 = vmatprep.subr.mxu0 0.0
      %316 = vmatpush2.msra.mxu0 0.0
      %317 = vmatprep.subr.mxu0 0.0
      %318 = vmatpush2.msra.mxu0 0.0
      %319 = vmatprep.subr.mxu0 0.0
      %320 = vmatpush2.msra.mxu0 0.0
      %321 = vmatprep.subr.mxu0 0.0
      %322 = vmatpush2.msra.mxu0 0.0
      %323 = vmatprep.subr.mxu0 0.0
      %324 = vmatpush2.msra.mxu0 0.0
      %325 = vmatprep.subr.mxu0 0.0
      %326 = vmatpush2.msra.mxu0 0.0
      %327 = vmatprep.subr.mxu0 0.0
      %328 = vmatpush2.msra.mxu0 0.0
      %329 = vmatprep.subr.mxu0 0.0
      %330 = vmatpush2.msra.mxu0 0.0
      %331 = vmatprep.subr.mxu0 0.0
      %332 = vmatpush2.msra.mxu0 0.0
      %333 = vmatprep.subr.mxu0 0.0
      %334 = vmatpush2.msra.mxu0 0.0
      %335 = vmatprep.subr.mxu0 0.0
      %336 = vmatpush2.msra.mxu0 0.0
      %337 = vmatprep.subr.mxu0 0.0
      %338 = vmatpush2.msra.mxu0 0.0
      %339 = vmatprep.subr.mxu0 0.0
      %340 = vmatpush2.msra.mxu0 0.0
      %341 = vmatprep.subr.mxu0 0.0
      %342 = vmatpush2.msra.mxu0 0.0
      %343 = vmatprep.subr.mxu0 0.0
      %344 = vmatpush2.msra.mxu0 0.0
      %345 = vmatprep.subr.mxu0 0.0
      %346 = vmatpush2.msra.mxu0 0.0
      %347 = vmatprep.mubr.f32.mxu0 0.0
      %348 = vmatmul.mubr.f32.gmra.mxu0 %v260
      %v349 = vpop.f32.mrf.mxu0
      %v350 = vadd.f32 0.0, %v349
      %v351 = vpop.f32.mrf.mxu0
      %352 = vmatprep.mubr.f32.mxu0 0.0
      %353 = vmatmul.mubr.f32.gmra.mxu0 %v263
      %v354 = vpop.f32.mrf.mxu0
      %v355 = vadd.f32 0.0, %v354
      %v356 = vpop.f32.mrf.mxu0
      %357 = vmatprep.mubr.f32.mxu0 0.0
      %358 = vmatmul.mubr.f32.gmra.mxu0 %v266
      %v359 = vpop.f32.mrf.mxu0
      %v360 = vadd.f32 0.0, %v359
      %v361 = vpop.f32.mrf.mxu0
      %362 = vmatprep.mubr.f32.mxu0 0.0
      %363 = vmatmul.mubr.f32.gmra.mxu0 %v269
      %v364 = vpop.f32.mrf.mxu0
      %v365 = vadd.f32 0.0, %v364
      %v366 = vpop.f32.mrf.mxu0
      %367 = vmatprep.mubr.f32.mxu0 0.0
      %368 = vmatmul.mubr.f32.gmra.mxu0 %v272
      %v369 = vpop.f32.mrf.mxu0
      %v370 = vadd.f32 0.0, %v369
      %v371 = vpop.f32.mrf.mxu0
      %372 = vmatprep.mubr.f32.mxu0 0.0
      %373 = vmatmul.mubr.f32.gmra.mxu0 %v275
      %v374 = vpop.f32.mrf.mxu0
      %v375 = vadd.f32 0.0, %v374
      %v376 = vpop.f32.mrf.mxu0
      %377 = vmatprep.mubr.f32.mxu0 0.0
      %378 = vmatmul.mubr.f32.gmra.mxu0 %v278
      %v379 = vpop.f32.mrf.mxu0
      %v380 = vadd.f32 0.0, %v379
      %v381 = vpop.f32.mrf.mxu0
      %382 = vmatprep.mubr.f32.mxu0 0.0
      %383 = vmatmul.mubr.f32.gmra.mxu0 %v281
      %v384 = vpop.f32.mrf.mxu0
      %v385 = vadd.f32 0.0, %v384
      %v386 = vpop.f32.mrf.mxu0
      %387 = vdwg.mxu0
      %s388 = scalar_lea.vmem [#allocation7], 128
      %v389 = vld [vmem:[%s388] sm:$0xff]
      %v390 = vld [vmem:[%s388 + $0x8] sm:$0xff]
      %v391 = vld [vmem:[%s388 + $0x10] sm:$0xff]
      %v392 = vld [vmem:[%s388 + $0x18] sm:$0xff]
      %v393 = vld [vmem:[%s388 + $0x20] sm:$0xff]
      %v394 = vld [vmem:[%s388 + $0x28] sm:$0xff]
      %v395 = vld [vmem:[%s388 + $0x30] sm:$0xff]
      %v396 = vld [vmem:[%s388 + $0x38] sm:$0xff]
      %v397 = vadd.f32 %v96, %v104
      %v398 = vadd.f32 %v97, %v105
      %v399 = vadd.f32 %v98, %v106
      %v400 = vadd.f32 %v99, %v107
      %v401 = vadd.f32 %v100, %v108
      %v402 = vadd.f32 %v101, %v109
      %v403 = vadd.f32 %v102, %v110
      %v404 = vadd.f32 %v103, %v111
      %v406 = vsel %vm120, %v389, 0
      %v409 = vsel %vm120, %v390, 0
      %v412 = vsel %vm120, %v391, 0
      %v415 = vsel %vm120, %v392, 0
      %v418 = vsel %vm120, %v393, 0
      %v421 = vsel %vm120, %v394, 0
      %v424 = vsel %vm120, %v395, 0
      %v427 = vsel %vm120, %v396, 0
      %429 = vmatprep.subr.mxu0 0.0
      %430 = vmatpush1.msra.mxu0 0.0
      %431 = vmatprep.subr.mxu0 0.0
      %432 = vmatpush1.msra.mxu0 0.0
      %433 = vmatprep.subr.mxu0 0.0
      %434 = vmatpush1.msra.mxu0 0.0
      %435 = vmatprep.subr.mxu0 0.0
      %436 = vmatpush1.msra.mxu0 0.0
      %437 = vmatprep.subr.mxu0 0.0
      %438 = vmatpush1.msra.mxu0 0.0
      %439 = vmatprep.subr.mxu0 0.0
      %440 = vmatpush1.msra.mxu0 0.0
      %441 = vmatprep.subr.mxu0 0.0
      %442 = vmatpush1.msra.mxu0 0.0
      %443 = vmatprep.subr.mxu0 0.0
      %444 = vmatpush1.msra.mxu0 0.0
      %445 = vmatprep.subr.mxu0 0.0
      %446 = vmatpush1.msra.mxu0 %v404
      %447 = vmatprep.subr.mxu0 0.0
      %448 = vmatpush1.msra.mxu0 %v403
      %449 = vmatprep.subr.mxu0 0.0
      %450 = vmatpush1.msra.mxu0 %v402
      %451 = vmatprep.subr.mxu0 0.0
      %452 = vmatpush1.msra.mxu0 %v401
      %453 = vmatprep.subr.mxu0 0.0
      %454 = vmatpush1.msra.mxu0 %v400
      %455 = vmatprep.subr.mxu0 0.0
      %456 = vmatpush1.msra.mxu0 %v399
      %457 = vmatprep.subr.mxu0 0.0
      %458 = vmatpush1.msra.mxu0 %v398
      %459 = vmatprep.subr.mxu0 0.0
      %460 = vmatpush1.msra.mxu0 %v397
      %461 = vmatprep.subr.mxu0 0.0
      %462 = vmatpush2.msra.mxu0 0.0
      %463 = vmatprep.subr.mxu0 0.0
      %464 = vmatpush2.msra.mxu0 0.0
      %465 = vmatprep.subr.mxu0 0.0
      %466 = vmatpush2.msra.mxu0 0.0
      %467 = vmatprep.subr.mxu0 0.0
      %468 = vmatpush2.msra.mxu0 0.0
      %469 = vmatprep.subr.mxu0 0.0
      %470 = vmatpush2.msra.mxu0 0.0
      %471 = vmatprep.subr.mxu0 0.0
      %472 = vmatpush2.msra.mxu0 0.0
      %473 = vmatprep.subr.mxu0 0.0
      %474 = vmatpush2.msra.mxu0 0.0
      %475 = vmatprep.subr.mxu0 0.0
      %476 = vmatpush2.msra.mxu0 0.0
      %477 = vmatprep.subr.mxu0 0.0
      %478 = vmatpush2.msra.mxu0 0.0
      %479 = vmatprep.subr.mxu0 0.0
      %480 = vmatpush2.msra.mxu0 0.0
      %481 = vmatprep.subr.mxu0 0.0
      %482 = vmatpush2.msra.mxu0 0.0
      %483 = vmatprep.subr.mxu0 0.0
      %484 = vmatpush2.msra.mxu0 0.0
      %485 = vmatprep.subr.mxu0 0.0
      %486 = vmatpush2.msra.mxu0 0.0
      %487 = vmatprep.subr.mxu0 0.0
      %488 = vmatpush2.msra.mxu0 0.0
      %489 = vmatprep.subr.mxu0 0.0
      %490 = vmatpush2.msra.mxu0 0.0
      %491 = vmatprep.subr.mxu0 0.0
      %492 = vmatpush2.msra.mxu0 0.0
      %493 = vmatprep.mubr.f32.mxu0 0.0
      %494 = vmatmul.mubr.f32.gmra.mxu0 %v406
      %v495 = vpop.f32.mrf.mxu0
      %v496 = vadd.f32 0.0, %v495
      %v497 = vpop.f32.mrf.mxu0
      %498 = vmatprep.mubr.f32.mxu0 0.0
      %499 = vmatmul.mubr.f32.gmra.mxu0 %v409
      %v500 = vpop.f32.mrf.mxu0
      %v501 = vadd.f32 0.0, %v500
      %v502 = vpop.f32.mrf.mxu0
      %503 = vmatprep.mubr.f32.mxu0 0.0
      %504 = vmatmul.mubr.f32.gmra.mxu0 %v412
      %v505 = vpop.f32.mrf.mxu0
      %v506 = vadd.f32 0.0, %v505
      %v507 = vpop.f32.mrf.mxu0
      %508 = vmatprep.mubr.f32.mxu0 0.0
      %509 = vmatmul.mubr.f32.gmra.mxu0 %v415
      %v510 = vpop.f32.mrf.mxu0
      %v511 = vadd.f32 0.0, %v510
      %v512 = vpop.f32.mrf.mxu0
      %513 = vmatprep.mubr.f32.mxu0 0.0
      %514 = vmatmul.mubr.f32.gmra.mxu0 %v418
      %v515 = vpop.f32.mrf.mxu0
      %v516 = vadd.f32 0.0, %v515
      %v517 = vpop.f32.mrf.mxu0
      %518 = vmatprep.mubr.f32.mxu0 0.0
      %519 = vmatmul.mubr.f32.gmra.mxu0 %v421
      %v520 = vpop.f32.mrf.mxu0
      %v521 = vadd.f32 0.0, %v520
      %v522 = vpop.f32.mrf.mxu0
      %523 = vmatprep.mubr.f32.mxu0 0.0
      %524 = vmatmul.mubr.f32.gmra.mxu0 %v424
      %v525 = vpop.f32.mrf.mxu0
      %v526 = vadd.f32 0.0, %v525
      %v527 = vpop.f32.mrf.mxu0
      %528 = vmatprep.mubr.f32.mxu0 0.0
      %529 = vmatmul.mubr.f32.gmra.mxu0 %v427
      %v530 = vpop.f32.mrf.mxu0
      %v531 = vadd.f32 0.0, %v530
      %v532 = vpop.f32.mrf.mxu0
      %533 = vdwg.mxu0
      %v534 = vsub.f32 %v212, %v350
      %v535 = vsub.f32 %v217, %v355
      %v536 = vsub.f32 %v222, %v360
      %v537 = vsub.f32 %v227, %v365
      %v538 = vsub.f32 %v232, %v370
      %v539 = vsub.f32 %v237, %v375
      %v540 = vsub.f32 %v242, %v380
      %v541 = vsub.f32 %v247, %v385
      %v542 = vsub.f32 %v496, %v212
      %v543 = vsub.f32 %v501, %v217
      %v544 = vsub.f32 %v506, %v222
      %v545 = vsub.f32 %v511, %v227
      %v546 = vsub.f32 %v516, %v232
      %v547 = vsub.f32 %v521, %v237
      %v548 = vsub.f32 %v526, %v242
      %v549 = vsub.f32 %v531, %v247
      %v550 = vsub.f32 %v542, %v350
      %v551 = vsub.f32 %v543, %v355
      %v552 = vsub.f32 %v544, %v360
      %v553 = vsub.f32 %v545, %v365
      %v554 = vsub.f32 %v546, %v370
      %v555 = vsub.f32 %v547, %v375
      %v556 = vsub.f32 %v548, %v380
      %v557 = vsub.f32 %v549, %v385
      %v558 = vld [vmem:[#allocation8] sm:$0xff]
      %v559 = vld [vmem:[#allocation8 + $0x8] sm:$0xff]
      %v560 = vld [vmem:[#allocation8 + $0x10] sm:$0xff]
      %v561 = vld [vmem:[#allocation8 + $0x18] sm:$0xff]
      %v562 = vld [vmem:[#allocation8 + $0x20] sm:$0xff]
      %v563 = vld [vmem:[#allocation8 + $0x28] sm:$0xff]
      %v564 = vld [vmem:[#allocation8 + $0x30] sm:$0xff]
      %v565 = vld [vmem:[#allocation8 + $0x38] sm:$0xff]
      %v566 = vld [vmem:[#allocation8 + $0x40] sm:$0xff]
      %v567 = vld [vmem:[#allocation8 + $0x48] sm:$0xff]
      %v568 = vld [vmem:[#allocation8 + $0x50] sm:$0xff]
      %v569 = vld [vmem:[#allocation8 + $0x58] sm:$0xff]
      %v570 = vld [vmem:[#allocation8 + $0x60] sm:$0xff]
      %v571 = vld [vmem:[#allocation8 + $0x68] sm:$0xff]
      %v572 = vld [vmem:[#allocation8 + $0x70] sm:$0xff]
      %v573 = vld [vmem:[#allocation8 + $0x78] sm:$0xff]
      %574 = vmatprep.subr.mxu0 0.0
      %575 = vmatpush1.msra.mxu0 %v573
      %576 = vmatprep.subr.mxu0 0.0
      %577 = vmatpush1.msra.mxu0 %v572
      %578 = vmatprep.subr.mxu0 0.0
      %579 = vmatpush1.msra.mxu0 %v571
      %580 = vmatprep.subr.mxu0 0.0
      %581 = vmatpush1.msra.mxu0 %v570
      %582 = vmatprep.subr.mxu0 0.0
      %583 = vmatpush1.msra.mxu0 %v569
      %584 = vmatprep.subr.mxu0 0.0
      %585 = vmatpush1.msra.mxu0 %v568
      %586 = vmatprep.subr.mxu0 0.0
      %587 = vmatpush1.msra.mxu0 %v567
      %588 = vmatprep.subr.mxu0 0.0
      %589 = vmatpush1.msra.mxu0 %v566
      %590 = vmatprep.subr.mxu0 0.0
      %591 = vmatpush1.msra.mxu0 %v565
      %592 = vmatprep.subr.mxu0 0.0
      %593 = vmatpush1.msra.mxu0 %v564
      %594 = vmatprep.subr.mxu0 0.0
      %595 = vmatpush1.msra.mxu0 %v563
      %596 = vmatprep.subr.mxu0 0.0
      %597 = vmatpush1.msra.mxu0 %v562
      %598 = vmatprep.subr.mxu0 0.0
      %599 = vmatpush1.msra.mxu0 %v561
      %600 = vmatprep.subr.mxu0 0.0
      %601 = vmatpush1.msra.mxu0 %v560
      %602 = vmatprep.subr.mxu0 0.0
      %603 = vmatpush1.msra.mxu0 %v559
      %604 = vmatprep.subr.mxu0 0.0
      %605 = vmatpush1.msra.mxu0 %v558
      %606 = vmatprep.subr.mxu0 0.0
      %607 = vmatpush2.msra.mxu0 0.0
      %608 = vmatprep.subr.mxu0 0.0
      %609 = vmatpush2.msra.mxu0 0.0
      %610 = vmatprep.subr.mxu0 0.0
      %611 = vmatpush2.msra.mxu0 0.0
      %612 = vmatprep.subr.mxu0 0.0
      %613 = vmatpush2.msra.mxu0 0.0
      %614 = vmatprep.subr.mxu0 0.0
      %615 = vmatpush2.msra.mxu0 0.0
      %616 = vmatprep.subr.mxu0 0.0
      %617 = vmatpush2.msra.mxu0 0.0
      %618 = vmatprep.subr.mxu0 0.0
      %619 = vmatpush2.msra.mxu0 0.0
      %620 = vmatprep.subr.mxu0 0.0
      %621 = vmatpush2.msra.mxu0 0.0
      %622 = vmatprep.subr.mxu0 0.0
      %623 = vmatpush2.msra.mxu0 0.0
      %624 = vmatprep.subr.mxu0 0.0
      %625 = vmatpush2.msra.mxu0 0.0
      %626 = vmatprep.subr.mxu0 0.0
      %627 = vmatpush2.msra.mxu0 0.0
      %628 = vmatprep.subr.mxu0 0.0
      %629 = vmatpush2.msra.mxu0 0.0
      %630 = vmatprep.subr.mxu0 0.0
      %631 = vmatpush2.msra.mxu0 0.0
      %632 = vmatprep.subr.mxu0 0.0
      %633 = vmatpush2.msra.mxu0 0.0
      %634 = vmatprep.subr.mxu0 0.0
      %635 = vmatpush2.msra.mxu0 0.0
      %636 = vmatprep.subr.mxu0 0.0
      %637 = vmatpush2.msra.mxu0 0.0
      %638 = vmatprep.mubr.f32.mxu0 0.0
      %639 = vmatmul.mubr.f32.gmra.mxu0 %v534
      %v640 = vpop.f32.mrf.mxu0
      %v641 = vadd.f32 0.0, %v640
      %v642 = vpop.f32.mrf.mxu0
      %643 = vmatprep.mubr.f32.mxu0 0.0
      %644 = vmatmul.mubr.f32.gmra.mxu0 %v535
      %v645 = vpop.f32.mrf.mxu0
      %v646 = vadd.f32 0.0, %v645
      %v647 = vpop.f32.mrf.mxu0
      %648 = vmatprep.mubr.f32.mxu0 0.0
      %649 = vmatmul.mubr.f32.gmra.mxu0 %v536
      %v650 = vpop.f32.mrf.mxu0
      %v651 = vadd.f32 0.0, %v650
      %v652 = vpop.f32.mrf.mxu0
      %653 = vmatprep.mubr.f32.mxu0 0.0
      %654 = vmatmul.mubr.f32.gmra.mxu0 %v537
      %v655 = vpop.f32.mrf.mxu0
      %v656 = vadd.f32 0.0, %v655
      %v657 = vpop.f32.mrf.mxu0
      %658 = vmatprep.mubr.f32.mxu0 0.0
      %659 = vmatmul.mubr.f32.gmra.mxu0 %v538
      %v660 = vpop.f32.mrf.mxu0
      %v661 = vadd.f32 0.0, %v660
      %v662 = vpop.f32.mrf.mxu0
      %663 = vmatprep.mubr.f32.mxu0 0.0
      %664 = vmatmul.mubr.f32.gmra.mxu0 %v539
      %v665 = vpop.f32.mrf.mxu0
      %v666 = vadd.f32 0.0, %v665
      %v667 = vpop.f32.mrf.mxu0
      %668 = vmatprep.mubr.f32.mxu0 0.0
      %669 = vmatmul.mubr.f32.gmra.mxu0 %v540
      %v670 = vpop.f32.mrf.mxu0
      %v671 = vadd.f32 0.0, %v670
      %v672 = vpop.f32.mrf.mxu0
      %673 = vmatprep.mubr.f32.mxu0 0.0
      %674 = vmatmul.mubr.f32.gmra.mxu0 %v541
      %v675 = vpop.f32.mrf.mxu0
      %v676 = vadd.f32 0.0, %v675
      %v677 = vpop.f32.mrf.mxu0
      %678 = vdwg.mxu0
      %s679 = scalar_lea.vmem [#allocation8], 128
      %v680 = vld [vmem:[%s679] sm:$0xff]
      %v681 = vld [vmem:[%s679 + $0x8] sm:$0xff]
      %v682 = vld [vmem:[%s679 + $0x10] sm:$0xff]
      %v683 = vld [vmem:[%s679 + $0x18] sm:$0xff]
      %v684 = vld [vmem:[%s679 + $0x20] sm:$0xff]
      %v685 = vld [vmem:[%s679 + $0x28] sm:$0xff]
      %v686 = vld [vmem:[%s679 + $0x30] sm:$0xff]
      %v687 = vld [vmem:[%s679 + $0x38] sm:$0xff]
      %v688 = vld [vmem:[%s679 + $0x40] sm:$0xff]
      %v689 = vld [vmem:[%s679 + $0x48] sm:$0xff]
      %v690 = vld [vmem:[%s679 + $0x50] sm:$0xff]
      %v691 = vld [vmem:[%s679 + $0x58] sm:$0xff]
      %v692 = vld [vmem:[%s679 + $0x60] sm:$0xff]
      %v693 = vld [vmem:[%s679 + $0x68] sm:$0xff]
      %v694 = vld [vmem:[%s679 + $0x70] sm:$0xff]
      %v695 = vld [vmem:[%s679 + $0x78] sm:$0xff]
      %696 = vmatprep.subr.mxu0 0.0
      %697 = vmatpush1.msra.mxu0 %v695
      %698 = vmatprep.subr.mxu0 0.0
      %699 = vmatpush1.msra.mxu0 %v694
      %700 = vmatprep.subr.mxu0 0.0
      %701 = vmatpush1.msra.mxu0 %v693
      %702 = vmatprep.subr.mxu0 0.0
      %703 = vmatpush1.msra.mxu0 %v692
      %704 = vmatprep.subr.mxu0 0.0
      %705 = vmatpush1.msra.mxu0 %v691
      %706 = vmatprep.subr.mxu0 0.0
      %707 = vmatpush1.msra.mxu0 %v690
      %708 = vmatprep.subr.mxu0 0.0
      %709 = vmatpush1.msra.mxu0 %v689
      %710 = vmatprep.subr.mxu0 0.0
      %711 = vmatpush1.msra.mxu0 %v688
      %712 = vmatprep.subr.mxu0 0.0
      %713 = vmatpush1.msra.mxu0 %v687
      %714 = vmatprep.subr.mxu0 0.0
      %715 = vmatpush1.msra.mxu0 %v686
      %716 = vmatprep.subr.mxu0 0.0
      %717 = vmatpush1.msra.mxu0 %v685
      %718 = vmatprep.subr.mxu0 0.0
      %719 = vmatpush1.msra.mxu0 %v684
      %720 = vmatprep.subr.mxu0 0.0
      %721 = vmatpush1.msra.mxu0 %v683
      %722 = vmatprep.subr.mxu0 0.0
      %723 = vmatpush1.msra.mxu0 %v682
      %724 = vmatprep.subr.mxu0 0.0
      %725 = vmatpush1.msra.mxu0 %v681
      %726 = vmatprep.subr.mxu0 0.0
      %727 = vmatpush1.msra.mxu0 %v680
      %728 = vmatprep.subr.mxu0 0.0
      %729 = vmatpush2.msra.mxu0 0.0
      %730 = vmatprep.subr.mxu0 0.0
      %731 = vmatpush2.msra.mxu0 0.0
      %732 = vmatprep.subr.mxu0 0.0
      %733 = vmatpush2.msra.mxu0 0.0
      %734 = vmatprep.subr.mxu0 0.0
      %735 = vmatpush2.msra.mxu0 0.0
      %736 = vmatprep.subr.mxu0 0.0
      %737 = vmatpush2.msra.mxu0 0.0
      %738 = vmatprep.subr.mxu0 0.0
      %739 = vmatpush2.msra.mxu0 0.0
      %740 = vmatprep.subr.mxu0 0.0
      %741 = vmatpush2.msra.mxu0 0.0
      %742 = vmatprep.subr.mxu0 0.0
      %743 = vmatpush2.msra.mxu0 0.0
      %744 = vmatprep.subr.mxu0 0.0
      %745 = vmatpush2.msra.mxu0 0.0
      %746 = vmatprep.subr.mxu0 0.0
      %747 = vmatpush2.msra.mxu0 0.0
      %748 = vmatprep.subr.mxu0 0.0
      %749 = vmatpush2.msra.mxu0 0.0
      %750 = vmatprep.subr.mxu0 0.0
      %751 = vmatpush2.msra.mxu0 0.0
      %752 = vmatprep.subr.mxu0 0.0
      %753 = vmatpush2.msra.mxu0 0.0
      %754 = vmatprep.subr.mxu0 0.0
      %755 = vmatpush2.msra.mxu0 0.0
      %756 = vmatprep.subr.mxu0 0.0
      %757 = vmatpush2.msra.mxu0 0.0
      %758 = vmatprep.subr.mxu0 0.0
      %759 = vmatpush2.msra.mxu0 0.0
      %760 = vmatprep.mubr.f32.mxu0 0.0
      %761 = vmatmul.mubr.f32.gmra.mxu0 %v550
      %v762 = vpop.f32.mrf.mxu0
      %v763 = vadd.f32 0.0, %v762
      %v764 = vpop.f32.mrf.mxu0
      %765 = vmatprep.mubr.f32.mxu0 0.0
      %766 = vmatmul.mubr.f32.gmra.mxu0 %v551
      %v767 = vpop.f32.mrf.mxu0
      %v768 = vadd.f32 0.0, %v767
      %v769 = vpop.f32.mrf.mxu0
      %770 = vmatprep.mubr.f32.mxu0 0.0
      %771 = vmatmul.mubr.f32.gmra.mxu0 %v552
      %v772 = vpop.f32.mrf.mxu0
      %v773 = vadd.f32 0.0, %v772
      %v774 = vpop.f32.mrf.mxu0
      %775 = vmatprep.mubr.f32.mxu0 0.0
      %776 = vmatmul.mubr.f32.gmra.mxu0 %v553
      %v777 = vpop.f32.mrf.mxu0
      %v778 = vadd.f32 0.0, %v777
      %v779 = vpop.f32.mrf.mxu0
      %780 = vmatprep.mubr.f32.mxu0 0.0
      %781 = vmatmul.mubr.f32.gmra.mxu0 %v554
      %v782 = vpop.f32.mrf.mxu0
      %v783 = vadd.f32 0.0, %v782
      %v784 = vpop.f32.mrf.mxu0
      %785 = vmatprep.mubr.f32.mxu0 0.0
      %786 = vmatmul.mubr.f32.gmra.mxu0 %v555
      %v787 = vpop.f32.mrf.mxu0
      %v788 = vadd.f32 0.0, %v787
      %v789 = vpop.f32.mrf.mxu0
      %790 = vmatprep.mubr.f32.mxu0 0.0
      %791 = vmatmul.mubr.f32.gmra.mxu0 %v556
      %v792 = vpop.f32.mrf.mxu0
      %v793 = vadd.f32 0.0, %v792
      %v794 = vpop.f32.mrf.mxu0
      %795 = vmatprep.mubr.f32.mxu0 0.0
      %796 = vmatmul.mubr.f32.gmra.mxu0 %v557
      %v797 = vpop.f32.mrf.mxu0
      %v798 = vadd.f32 0.0, %v797
      %v799 = vpop.f32.mrf.mxu0
      %800 = vdwg.mxu0
      %v801 = vadd.f32 %v534, %v550
      %v802 = vadd.f32 %v535, %v551
      %v803 = vadd.f32 %v536, %v552
      %v804 = vadd.f32 %v537, %v553
      %v805 = vadd.f32 %v538, %v554
      %v806 = vadd.f32 %v539, %v555
      %v807 = vadd.f32 %v540, %v556
      %v808 = vadd.f32 %v541, %v557
      %s809 = scalar_lea.vmem [#allocation8], 256
      %v810 = vld [vmem:[%s809] sm:$0xff]
      %v811 = vld [vmem:[%s809 + $0x8] sm:$0xff]
      %v812 = vld [vmem:[%s809 + $0x10] sm:$0xff]
      %v813 = vld [vmem:[%s809 + $0x18] sm:$0xff]
      %v814 = vld [vmem:[%s809 + $0x20] sm:$0xff]
      %v815 = vld [vmem:[%s809 + $0x28] sm:$0xff]
      %v816 = vld [vmem:[%s809 + $0x30] sm:$0xff]
      %v817 = vld [vmem:[%s809 + $0x38] sm:$0xff]
      %v818 = vld [vmem:[%s809 + $0x40] sm:$0xff]
      %v819 = vld [vmem:[%s809 + $0x48] sm:$0xff]
      %v820 = vld [vmem:[%s809 + $0x50] sm:$0xff]
      %v821 = vld [vmem:[%s809 + $0x58] sm:$0xff]
      %v822 = vld [vmem:[%s809 + $0x60] sm:$0xff]
      %v823 = vld [vmem:[%s809 + $0x68] sm:$0xff]
      %v824 = vld [vmem:[%s809 + $0x70] sm:$0xff]
      %v825 = vld [vmem:[%s809 + $0x78] sm:$0xff]
      %826 = vmatprep.subr.mxu0 0.0
      %827 = vmatpush1.msra.mxu0 %v825
      %828 = vmatprep.subr.mxu0 0.0
      %829 = vmatpush1.msra.mxu0 %v824
      %830 = vmatprep.subr.mxu0 0.0
      %831 = vmatpush1.msra.mxu0 %v823
      %832 = vmatprep.subr.mxu0 0.0
      %833 = vmatpush1.msra.mxu0 %v822
      %834 = vmatprep.subr.mxu0 0.0
      %835 = vmatpush1.msra.mxu0 %v821
      %836 = vmatprep.subr.mxu0 0.0
      %837 = vmatpush1.msra.mxu0 %v820
      %838 = vmatprep.subr.mxu0 0.0
      %839 = vmatpush1.msra.mxu0 %v819
      %840 = vmatprep.subr.mxu0 0.0
      %841 = vmatpush1.msra.mxu0 %v818
      %842 = vmatprep.subr.mxu0 0.0
      %843 = vmatpush1.msra.mxu0 %v817
      %844 = vmatprep.subr.mxu0 0.0
      %845 = vmatpush1.msra.mxu0 %v816
      %846 = vmatprep.subr.mxu0 0.0
      %847 = vmatpush1.msra.mxu0 %v815
      %848 = vmatprep.subr.mxu0 0.0
      %849 = vmatpush1.msra.mxu0 %v814
      %850 = vmatprep.subr.mxu0 0.0
      %851 = vmatpush1.msra.mxu0 %v813
      %852 = vmatprep.subr.mxu0 0.0
      %853 = vmatpush1.msra.mxu0 %v812
      %854 = vmatprep.subr.mxu0 0.0
      %855 = vmatpush1.msra.mxu0 %v811
      %856 = vmatprep.subr.mxu0 0.0
      %857 = vmatpush1.msra.mxu0 %v810
      %858 = vmatprep.subr.mxu0 0.0
      %859 = vmatpush2.msra.mxu0 0.0
      %860 = vmatprep.subr.mxu0 0.0
      %861 = vmatpush2.msra.mxu0 0.0
      %862 = vmatprep.subr.mxu0 0.0
      %863 = vmatpush2.msra.mxu0 0.0
      %864 = vmatprep.subr.mxu0 0.0
      %865 = vmatpush2.msra.mxu0 0.0
      %866 = vmatprep.subr.mxu0 0.0
      %867 = vmatpush2.msra.mxu0 0.0
      %868 = vmatprep.subr.mxu0 0.0
      %869 = vmatpush2.msra.mxu0 0.0
      %870 = vmatprep.subr.mxu0 0.0
      %871 = vmatpush2.msra.mxu0 0.0
      %872 = vmatprep.subr.mxu0 0.0
      %873 = vmatpush2.msra.mxu0 0.0
      %874 = vmatprep.subr.mxu0 0.0
      %875 = vmatpush2.msra.mxu0 0.0
      %876 = vmatprep.subr.mxu0 0.0
      %877 = vmatpush2.msra.mxu0 0.0
      %878 = vmatprep.subr.mxu0 0.0
      %879 = vmatpush2.msra.mxu0 0.0
      %880 = vmatprep.subr.mxu0 0.0
      %881 = vmatpush2.msra.mxu0 0.0
      %882 = vmatprep.subr.mxu0 0.0
      %883 = vmatpush2.msra.mxu0 0.0
      %884 = vmatprep.subr.mxu0 0.0
      %885 = vmatpush2.msra.mxu0 0.0
      %886 = vmatprep.subr.mxu0 0.0
      %887 = vmatpush2.msra.mxu0 0.0
      %888 = vmatprep.subr.mxu0 0.0
      %889 = vmatpush2.msra.mxu0 0.0
      %890 = vmatprep.mubr.f32.mxu0 0.0
      %891 = vmatmul.mubr.f32.gmra.mxu0 %v801
      %v892 = vpop.f32.mrf.mxu0
      %v893 = vadd.f32 0.0, %v892
      %v894 = vpop.f32.mrf.mxu0
      %895 = vmatprep.mubr.f32.mxu0 0.0
      %896 = vmatmul.mubr.f32.gmra.mxu0 %v802
      %v897 = vpop.f32.mrf.mxu0
      %v898 = vadd.f32 0.0, %v897
      %v899 = vpop.f32.mrf.mxu0
      %900 = vmatprep.mubr.f32.mxu0 0.0
      %901 = vmatmul.mubr.f32.gmra.mxu0 %v803
      %v902 = vpop.f32.mrf.mxu0
      %v903 = vadd.f32 0.0, %v902
      %v904 = vpop.f32.mrf.mxu0
      %905 = vmatprep.mubr.f32.mxu0 0.0
      %906 = vmatmul.mubr.f32.gmra.mxu0 %v804
      %v907 = vpop.f32.mrf.mxu0
      %v908 = vadd.f32 0.0, %v907
      %v909 = vpop.f32.mrf.mxu0
      %910 = vmatprep.mubr.f32.mxu0 0.0
      %911 = vmatmul.mubr.f32.gmra.mxu0 %v805
      %v912 = vpop.f32.mrf.mxu0
      %v913 = vadd.f32 0.0, %v912
      %v914 = vpop.f32.mrf.mxu0
      %915 = vmatprep.mubr.f32.mxu0 0.0
      %916 = vmatmul.mubr.f32.gmra.mxu0 %v806
      %v917 = vpop.f32.mrf.mxu0
      %v918 = vadd.f32 0.0, %v917
      %v919 = vpop.f32.mrf.mxu0
      %920 = vmatprep.mubr.f32.mxu0 0.0
      %921 = vmatmul.mubr.f32.gmra.mxu0 %v807
      %v922 = vpop.f32.mrf.mxu0
      %v923 = vadd.f32 0.0, %v922
      %v924 = vpop.f32.mrf.mxu0
      %925 = vmatprep.mubr.f32.mxu0 0.0
      %926 = vmatmul.mubr.f32.gmra.mxu0 %v808
      %v927 = vpop.f32.mrf.mxu0
      %v928 = vadd.f32 0.0, %v927
      %v929 = vpop.f32.mrf.mxu0
      %930 = vdwg.mxu0
      %v931 = vsub.f32 %v641, %v763
      %v932 = vsub.f32 %v646, %v768
      %v933 = vsub.f32 %v651, %v773
      %v934 = vsub.f32 %v656, %v778
      %v935 = vsub.f32 %v661, %v783
      %v936 = vsub.f32 %v666, %v788
      %v937 = vsub.f32 %v671, %v793
      %v938 = vsub.f32 %v676, %v798
      %v939 = vsub.f32 %v893, %v641
      %v940 = vsub.f32 %v898, %v646
      %v941 = vsub.f32 %v903, %v651
      %v942 = vsub.f32 %v908, %v656
      %v943 = vsub.f32 %v913, %v661
      %v944 = vsub.f32 %v918, %v666
      %v945 = vsub.f32 %v923, %v671
      %v946 = vsub.f32 %v928, %v676
      %v947 = vsub.f32 %v939, %v763
      %v948 = vsub.f32 %v940, %v768
      %v949 = vsub.f32 %v941, %v773
      %v950 = vsub.f32 %v942, %v778
      %v951 = vsub.f32 %v943, %v783
      %v952 = vsub.f32 %v944, %v788
      %v953 = vsub.f32 %v945, %v793
      %v954 = vsub.f32 %v946, %v798
      %s955 = scalar_lea.vmem [#allocation5], 128
      %v956 = vld [vmem:[%s955] sm:$0xff]
      %v957 = vld [vmem:[%s955 + $0x8] sm:$0xff]
      %v958 = vld [vmem:[%s955 + $0x10] sm:$0xff]
      %v959 = vld [vmem:[%s955 + $0x18] sm:$0xff]
      %v960 = vld [vmem:[%s955 + $0x20] sm:$0xff]
      %v961 = vld [vmem:[%s955 + $0x28] sm:$0xff]
      %v962 = vld [vmem:[%s955 + $0x30] sm:$0xff]
      %v963 = vld [vmem:[%s955 + $0x38] sm:$0xff]
      %s964 = scalar_lea.vmem [#allocation5], 192
      %v965 = vld [vmem:[%s964] sm:$0xff]
      %v966 = vld [vmem:[%s964 + $0x8] sm:$0xff]
      %v967 = vld [vmem:[%s964 + $0x10] sm:$0xff]
      %v968 = vld [vmem:[%s964 + $0x18] sm:$0xff]
      %v969 = vld [vmem:[%s964 + $0x20] sm:$0xff]
      %v970 = vld [vmem:[%s964 + $0x28] sm:$0xff]
      %v971 = vld [vmem:[%s964 + $0x30] sm:$0xff]
      %v972 = vld [vmem:[%s964 + $0x38] sm:$0xff]
      %v973 = vmul.f32 %v931, %v956
      %v974 = vmul.f32 %v932, %v957
      %v975 = vmul.f32 %v933, %v958
      %v976 = vmul.f32 %v934, %v959
      %v977 = vmul.f32 %v935, %v960
      %v978 = vmul.f32 %v936, %v961
      %v979 = vmul.f32 %v937, %v962
      %v980 = vmul.f32 %v938, %v963
      %v981 = vmul.f32 %v947, %v965
      %v982 = vmul.f32 %v948, %v966
      %v983 = vmul.f32 %v949, %v967
      %v984 = vmul.f32 %v950, %v968
      %v985 = vmul.f32 %v951, %v969
      %v986 = vmul.f32 %v952, %v970
      %v987 = vmul.f32 %v953, %v971
      %v988 = vmul.f32 %v954, %v972
      %v989 = vsub.f32 %v973, %v981
      %v990 = vsub.f32 %v974, %v982
      %v991 = vsub.f32 %v975, %v983
      %v992 = vsub.f32 %v976, %v984
      %v993 = vsub.f32 %v977, %v985
      %v994 = vsub.f32 %v978, %v986
      %v995 = vsub.f32 %v979, %v987
      %v996 = vsub.f32 %v980, %v988
      %v997 = vmul.f32 %v931, %v965
      %v998 = vmul.f32 %v932, %v966
      %v999 = vmul.f32 %v933, %v967
      %v1000 = vmul.f32 %v934, %v968
      %v1001 = vmul.f32 %v935, %v969
      %v1002 = vmul.f32 %v936, %v970
      %v1003 = vmul.f32 %v937, %v971
      %v1004 = vmul.f32 %v938, %v972
      %v1005 = vmul.f32 %v947, %v956
      %v1006 = vmul.f32 %v948, %v957
      %v1007 = vmul.f32 %v949, %v958
      %v1008 = vmul.f32 %v950, %v959
      %v1009 = vmul.f32 %v951, %v960
      %v1010 = vmul.f32 %v952, %v961
      %v1011 = vmul.f32 %v953, %v962
      %v1012 = vmul.f32 %v954, %v963
      %v1013 = vadd.f32 %v997, %v1005
      %v1014 = vadd.f32 %v998, %v1006
      %v1015 = vadd.f32 %v999, %v1007
      %v1016 = vadd.f32 %v1000, %v1008
      %v1017 = vadd.f32 %v1001, %v1009
      %v1018 = vadd.f32 %v1002, %v1010
      %v1019 = vadd.f32 %v1003, %v1011
      %v1020 = vadd.f32 %v1004, %v1012
      %s1021 = scalar_lea.vmem [#allocation7], 192
      %v1022 = vld [vmem:[%s1021] sm:$0xff]
      %v1023 = vld [vmem:[%s1021 + $0x8] sm:$0xff]
      %v1024 = vld [vmem:[%s1021 + $0x10] sm:$0xff]
      %v1025 = vld [vmem:[%s1021 + $0x18] sm:$0xff]
      %v1026 = vld [vmem:[%s1021 + $0x20] sm:$0xff]
      %v1027 = vld [vmem:[%s1021 + $0x28] sm:$0xff]
      %v1028 = vld [vmem:[%s1021 + $0x30] sm:$0xff]
      %v1029 = vld [vmem:[%s1021 + $0x38] sm:$0xff]
      %v1031 = vsel %vm120, %v1022, 0
      %v1034 = vsel %vm120, %v1023, 0
      %v1037 = vsel %vm120, %v1024, 0
      %v1040 = vsel %vm120, %v1025, 0
      %v1043 = vsel %vm120, %v1026, 0
      %v1046 = vsel %vm120, %v1027, 0
      %v1049 = vsel %vm120, %v1028, 0
      %v1052 = vsel %vm120, %v1029, 0
      %1054 = vmatprep.subr.mxu0 0.0
      %1055 = vmatpush1.msra.mxu0 0.0
      %1056 = vmatprep.subr.mxu0 0.0
      %1057 = vmatpush1.msra.mxu0 0.0
      %1058 = vmatprep.subr.mxu0 0.0
      %1059 = vmatpush1.msra.mxu0 0.0
      %1060 = vmatprep.subr.mxu0 0.0
      %1061 = vmatpush1.msra.mxu0 0.0
      %1062 = vmatprep.subr.mxu0 0.0
      %1063 = vmatpush1.msra.mxu0 0.0
      %1064 = vmatprep.subr.mxu0 0.0
      %1065 = vmatpush1.msra.mxu0 0.0
      %1066 = vmatprep.subr.mxu0 0.0
      %1067 = vmatpush1.msra.mxu0 0.0
      %1068 = vmatprep.subr.mxu0 0.0
      %1069 = vmatpush1.msra.mxu0 0.0
      %1070 = vmatprep.subr.mxu0 0.0
      %1071 = vmatpush1.msra.mxu0 %v996
      %1072 = vmatprep.subr.mxu0 0.0
      %1073 = vmatpush1.msra.mxu0 %v995
      %1074 = vmatprep.subr.mxu0 0.0
      %1075 = vmatpush1.msra.mxu0 %v994
      %1076 = vmatprep.subr.mxu0 0.0
      %1077 = vmatpush1.msra.mxu0 %v993
      %1078 = vmatprep.subr.mxu0 0.0
      %1079 = vmatpush1.msra.mxu0 %v992
      %1080 = vmatprep.subr.mxu0 0.0
      %1081 = vmatpush1.msra.mxu0 %v991
      %1082 = vmatprep.subr.mxu0 0.0
      %1083 = vmatpush1.msra.mxu0 %v990
      %1084 = vmatprep.subr.mxu0 0.0
      %1085 = vmatpush1.msra.mxu0 %v989
      %1086 = vmatprep.subr.mxu0 0.0
      %1087 = vmatpush2.msra.mxu0 0.0
      %1088 = vmatprep.subr.mxu0 0.0
      %1089 = vmatpush2.msra.mxu0 0.0
      %1090 = vmatprep.subr.mxu0 0.0
      %1091 = vmatpush2.msra.mxu0 0.0
      %1092 = vmatprep.subr.mxu0 0.0
      %1093 = vmatpush2.msra.mxu0 0.0
      %1094 = vmatprep.subr.mxu0 0.0
      %1095 = vmatpush2.msra.mxu0 0.0
      %1096 = vmatprep.subr.mxu0 0.0
      %1097 = vmatpush2.msra.mxu0 0.0
      %1098 = vmatprep.subr.mxu0 0.0
      %1099 = vmatpush2.msra.mxu0 0.0
      %1100 = vmatprep.subr.mxu0 0.0
      %1101 = vmatpush2.msra.mxu0 0.0
      %1102 = vmatprep.subr.mxu0 0.0
      %1103 = vmatpush2.msra.mxu0 0.0
      %1104 = vmatprep.subr.mxu0 0.0
      %1105 = vmatpush2.msra.mxu0 0.0
      %1106 = vmatprep.subr.mxu0 0.0
      %1107 = vmatpush2.msra.mxu0 0.0
      %1108 = vmatprep.subr.mxu0 0.0
      %1109 = vmatpush2.msra.mxu0 0.0
      %1110 = vmatprep.subr.mxu0 0.0
      %1111 = vmatpush2.msra.mxu0 0.0
      %1112 = vmatprep.subr.mxu0 0.0
      %1113 = vmatpush2.msra.mxu0 0.0
      %1114 = vmatprep.subr.mxu0 0.0
      %1115 = vmatpush2.msra.mxu0 0.0
      %1116 = vmatprep.subr.mxu0 0.0
      %1117 = vmatpush2.msra.mxu0 0.0
      %1118 = vmatprep.mubr.f32.mxu0 0.0
      %1119 = vmatmul.mubr.f32.gmra.mxu0 %v1031
      %v1120 = vpop.f32.mrf.mxu0
      %v1121 = vadd.f32 0.0, %v1120
      %v1122 = vpop.f32.mrf.mxu0
      %1123 = vmatprep.mubr.f32.mxu0 0.0
      %1124 = vmatmul.mubr.f32.gmra.mxu0 %v1034
      %v1125 = vpop.f32.mrf.mxu0
      %v1126 = vadd.f32 0.0, %v1125
      %v1127 = vpop.f32.mrf.mxu0
      %1128 = vmatprep.mubr.f32.mxu0 0.0
      %1129 = vmatmul.mubr.f32.gmra.mxu0 %v1037
      %v1130 = vpop.f32.mrf.mxu0
      %v1131 = vadd.f32 0.0, %v1130
      %v1132 = vpop.f32.mrf.mxu0
      %1133 = vmatprep.mubr.f32.mxu0 0.0
      %1134 = vmatmul.mubr.f32.gmra.mxu0 %v1040
      %v1135 = vpop.f32.mrf.mxu0
      %v1136 = vadd.f32 0.0, %v1135
      %v1137 = vpop.f32.mrf.mxu0
      %1138 = vmatprep.mubr.f32.mxu0 0.0
      %1139 = vmatmul.mubr.f32.gmra.mxu0 %v1043
      %v1140 = vpop.f32.mrf.mxu0
      %v1141 = vadd.f32 0.0, %v1140
      %v1142 = vpop.f32.mrf.mxu0
      %1143 = vmatprep.mubr.f32.mxu0 0.0
      %1144 = vmatmul.mubr.f32.gmra.mxu0 %v1046
      %v1145 = vpop.f32.mrf.mxu0
      %v1146 = vadd.f32 0.0, %v1145
      %v1147 = vpop.f32.mrf.mxu0
      %1148 = vmatprep.mubr.f32.mxu0 0.0
      %1149 = vmatmul.mubr.f32.gmra.mxu0 %v1049
      %v1150 = vpop.f32.mrf.mxu0
      %v1151 = vadd.f32 0.0, %v1150
      %v1152 = vpop.f32.mrf.mxu0
      %1153 = vmatprep.mubr.f32.mxu0 0.0
      %1154 = vmatmul.mubr.f32.gmra.mxu0 %v1052
      %v1155 = vpop.f32.mrf.mxu0
      %v1156 = vadd.f32 0.0, %v1155
      %v1157 = vpop.f32.mrf.mxu0
      %1158 = vdwg.mxu0
      %s1159 = scalar_lea.vmem [#allocation7], 256
      %v1160 = vld [vmem:[%s1159] sm:$0xff]
      %v1161 = vld [vmem:[%s1159 + $0x8] sm:$0xff]
      %v1162 = vld [vmem:[%s1159 + $0x10] sm:$0xff]
      %v1163 = vld [vmem:[%s1159 + $0x18] sm:$0xff]
      %v1164 = vld [vmem:[%s1159 + $0x20] sm:$0xff]
      %v1165 = vld [vmem:[%s1159 + $0x28] sm:$0xff]
      %v1166 = vld [vmem:[%s1159 + $0x30] sm:$0xff]
      %v1167 = vld [vmem:[%s1159 + $0x38] sm:$0xff]
      %v1169 = vsel %vm120, %v1160, 0
      %v1172 = vsel %vm120, %v1161, 0
      %v1175 = vsel %vm120, %v1162, 0
      %v1178 = vsel %vm120, %v1163, 0
      %v1181 = vsel %vm120, %v1164, 0
      %v1184 = vsel %vm120, %v1165, 0
      %v1187 = vsel %vm120, %v1166, 0
      %v1190 = vsel %vm120, %v1167, 0
      %1192 = vmatprep.subr.mxu0 0.0
      %1193 = vmatpush1.msra.mxu0 0.0
      %1194 = vmatprep.subr.mxu0 0.0
      %1195 = vmatpush1.msra.mxu0 0.0
      %1196 = vmatprep.subr.mxu0 0.0
      %1197 = vmatpush1.msra.mxu0 0.0
      %1198 = vmatprep.subr.mxu0 0.0
      %1199 = vmatpush1.msra.mxu0 0.0
      %1200 = vmatprep.subr.mxu0 0.0
      %1201 = vmatpush1.msra.mxu0 0.0
      %1202 = vmatprep.subr.mxu0 0.0
      %1203 = vmatpush1.msra.mxu0 0.0
      %1204 = vmatprep.subr.mxu0 0.0
      %1205 = vmatpush1.msra.mxu0 0.0
      %1206 = vmatprep.subr.mxu0 0.0
      %1207 = vmatpush1.msra.mxu0 0.0
      %1208 = vmatprep.subr.mxu0 0.0
      %1209 = vmatpush1.msra.mxu0 %v1020
      %1210 = vmatprep.subr.mxu0 0.0
      %1211 = vmatpush1.msra.mxu0 %v1019
      %1212 = vmatprep.subr.mxu0 0.0
      %1213 = vmatpush1.msra.mxu0 %v1018
      %1214 = vmatprep.subr.mxu0 0.0
      %1215 = vmatpush1.msra.mxu0 %v1017
      %1216 = vmatprep.subr.mxu0 0.0
      %1217 = vmatpush1.msra.mxu0 %v1016
      %1218 = vmatprep.subr.mxu0 0.0
      %1219 = vmatpush1.msra.mxu0 %v1015
      %1220 = vmatprep.subr.mxu0 0.0
      %1221 = vmatpush1.msra.mxu0 %v1014
      %1222 = vmatprep.subr.mxu0 0.0
      %1223 = vmatpush1.msra.mxu0 %v1013
      %1224 = vmatprep.subr.mxu0 0.0
      %1225 = vmatpush2.msra.mxu0 0.0
      %1226 = vmatprep.subr.mxu0 0.0
      %1227 = vmatpush2.msra.mxu0 0.0
      %1228 = vmatprep.subr.mxu0 0.0
      %1229 = vmatpush2.msra.mxu0 0.0
      %1230 = vmatprep.subr.mxu0 0.0
      %1231 = vmatpush2.msra.mxu0 0.0
      %1232 = vmatprep.subr.mxu0 0.0
      %1233 = vmatpush2.msra.mxu0 0.0
      %1234 = vmatprep.subr.mxu0 0.0
      %1235 = vmatpush2.msra.mxu0 0.0
      %1236 = vmatprep.subr.mxu0 0.0
      %1237 = vmatpush2.msra.mxu0 0.0
      %1238 = vmatprep.subr.mxu0 0.0
      %1239 = vmatpush2.msra.mxu0 0.0
      %1240 = vmatprep.subr.mxu0 0.0
      %1241 = vmatpush2.msra.mxu0 0.0
      %1242 = vmatprep.subr.mxu0 0.0
      %1243 = vmatpush2.msra.mxu0 0.0
      %1244 = vmatprep.subr.mxu0 0.0
      %1245 = vmatpush2.msra.mxu0 0.0
      %1246 = vmatprep.subr.mxu0 0.0
      %1247 = vmatpush2.msra.mxu0 0.0
      %1248 = vmatprep.subr.mxu0 0.0
      %1249 = vmatpush2.msra.mxu0 0.0
      %1250 = vmatprep.subr.mxu0 0.0
      %1251 = vmatpush2.msra.mxu0 0.0
      %1252 = vmatprep.subr.mxu0 0.0
      %1253 = vmatpush2.msra.mxu0 0.0
      %1254 = vmatprep.subr.mxu0 0.0
      %1255 = vmatpush2.msra.mxu0 0.0
      %1256 = vmatprep.mubr.f32.mxu0 0.0
      %1257 = vmatmul.mubr.f32.gmra.mxu0 %v1169
      %v1258 = vpop.f32.mrf.mxu0
      %v1259 = vadd.f32 0.0, %v1258
      %v1260 = vpop.f32.mrf.mxu0
      %1261 = vmatprep.mubr.f32.mxu0 0.0
      %1262 = vmatmul.mubr.f32.gmra.mxu0 %v1172
      %v1263 = vpop.f32.mrf.mxu0
      %v1264 = vadd.f32 0.0, %v1263
      %v1265 = vpop.f32.mrf.mxu0
      %1266 = vmatprep.mubr.f32.mxu0 0.0
      %1267 = vmatmul.mubr.f32.gmra.mxu0 %v1175
      %v1268 = vpop.f32.mrf.mxu0
      %v1269 = vadd.f32 0.0, %v1268
      %v1270 = vpop.f32.mrf.mxu0
      %1271 = vmatprep.mubr.f32.mxu0 0.0
      %1272 = vmatmul.mubr.f32.gmra.mxu0 %v1178
      %v1273 = vpop.f32.mrf.mxu0
      %v1274 = vadd.f32 0.0, %v1273
      %v1275 = vpop.f32.mrf.mxu0
      %1276 = vmatprep.mubr.f32.mxu0 0.0
      %1277 = vmatmul.mubr.f32.gmra.mxu0 %v1181
      %v1278 = vpop.f32.mrf.mxu0
      %v1279 = vadd.f32 0.0, %v1278
      %v1280 = vpop.f32.mrf.mxu0
      %1281 = vmatprep.mubr.f32.mxu0 0.0
      %1282 = vmatmul.mubr.f32.gmra.mxu0 %v1184
      %v1283 = vpop.f32.mrf.mxu0
      %v1284 = vadd.f32 0.0, %v1283
      %v1285 = vpop.f32.mrf.mxu0
      %1286 = vmatprep.mubr.f32.mxu0 0.0
      %1287 = vmatmul.mubr.f32.gmra.mxu0 %v1187
      %v1288 = vpop.f32.mrf.mxu0
      %v1289 = vadd.f32 0.0, %v1288
      %v1290 = vpop.f32.mrf.mxu0
      %1291 = vmatprep.mubr.f32.mxu0 0.0
      %1292 = vmatmul.mubr.f32.gmra.mxu0 %v1190
      %v1293 = vpop.f32.mrf.mxu0
      %v1294 = vadd.f32 0.0, %v1293
      %v1295 = vpop.f32.mrf.mxu0
      %1296 = vdwg.mxu0
      %s1297 = scalar_lea.vmem [#allocation7], 320
      %v1298 = vld [vmem:[%s1297] sm:$0xff]
      %v1299 = vld [vmem:[%s1297 + $0x8] sm:$0xff]
      %v1300 = vld [vmem:[%s1297 + $0x10] sm:$0xff]
      %v1301 = vld [vmem:[%s1297 + $0x18] sm:$0xff]
      %v1302 = vld [vmem:[%s1297 + $0x20] sm:$0xff]
      %v1303 = vld [vmem:[%s1297 + $0x28] sm:$0xff]
      %v1304 = vld [vmem:[%s1297 + $0x30] sm:$0xff]
      %v1305 = vld [vmem:[%s1297 + $0x38] sm:$0xff]
      %v1306 = vadd.f32 %v989, %v1013
      %v1307 = vadd.f32 %v990, %v1014
      %v1308 = vadd.f32 %v991, %v1015
      %v1309 = vadd.f32 %v992, %v1016
      %v1310 = vadd.f32 %v993, %v1017
      %v1311 = vadd.f32 %v994, %v1018
      %v1312 = vadd.f32 %v995, %v1019
      %v1313 = vadd.f32 %v996, %v1020
      %v1315 = vsel %vm120, %v1298, 0
      %v1318 = vsel %vm120, %v1299, 0
      %v1321 = vsel %vm120, %v1300, 0
      %v1324 = vsel %vm120, %v1301, 0
      %v1327 = vsel %vm120, %v1302, 0
      %v1330 = vsel %vm120, %v1303, 0
      %v1333 = vsel %vm120, %v1304, 0
      %v1336 = vsel %vm120, %v1305, 0
      %1338 = vmatprep.subr.mxu0 0.0
      %1339 = vmatpush1.msra.mxu0 0.0
      %1340 = vmatprep.subr.mxu0 0.0
      %1341 = vmatpush1.msra.mxu0 0.0
      %1342 = vmatprep.subr.mxu0 0.0
      %1343 = vmatpush1.msra.mxu0 0.0
      %1344 = vmatprep.subr.mxu0 0.0
      %1345 = vmatpush1.msra.mxu0 0.0
      %1346 = vmatprep.subr.mxu0 0.0
      %1347 = vmatpush1.msra.mxu0 0.0
      %1348 = vmatprep.subr.mxu0 0.0
      %1349 = vmatpush1.msra.mxu0 0.0
      %1350 = vmatprep.subr.mxu0 0.0
      %1351 = vmatpush1.msra.mxu0 0.0
      %1352 = vmatprep.subr.mxu0 0.0
      %1353 = vmatpush1.msra.mxu0 0.0
      %1354 = vmatprep.subr.mxu0 0.0
      %1355 = vmatpush1.msra.mxu0 %v1313
      %1356 = vmatprep.subr.mxu0 0.0
      %1357 = vmatpush1.msra.mxu0 %v1312
      %1358 = vmatprep.subr.mxu0 0.0
      %1359 = vmatpush1.msra.mxu0 %v1311
      %1360 = vmatprep.subr.mxu0 0.0
      %1361 = vmatpush1.msra.mxu0 %v1310
      %1362 = vmatprep.subr.mxu0 0.0
      %1363 = vmatpush1.msra.mxu0 %v1309
      %1364 = vmatprep.subr.mxu0 0.0
      %1365 = vmatpush1.msra.mxu0 %v1308
      %1366 = vmatprep.subr.mxu0 0.0
      %1367 = vmatpush1.msra.mxu0 %v1307
      %1368 = vmatprep.subr.mxu0 0.0
      %1369 = vmatpush1.msra.mxu0 %v1306
      %1370 = vmatprep.subr.mxu0 0.0
      %1371 = vmatpush2.msra.mxu0 0.0
      %1372 = vmatprep.subr.mxu0 0.0
      %1373 = vmatpush2.msra.mxu0 0.0
      %1374 = vmatprep.subr.mxu0 0.0
      %1375 = vmatpush2.msra.mxu0 0.0
      %1376 = vmatprep.subr.mxu0 0.0
      %1377 = vmatpush2.msra.mxu0 0.0
      %1378 = vmatprep.subr.mxu0 0.0
      %1379 = vmatpush2.msra.mxu0 0.0
      %1380 = vmatprep.subr.mxu0 0.0
      %1381 = vmatpush2.msra.mxu0 0.0
      %1382 = vmatprep.subr.mxu0 0.0
      %1383 = vmatpush2.msra.mxu0 0.0
      %1384 = vmatprep.subr.mxu0 0.0
      %1385 = vmatpush2.msra.mxu0 0.0
      %1386 = vmatprep.subr.mxu0 0.0
      %1387 = vmatpush2.msra.mxu0 0.0
      %1388 = vmatprep.subr.mxu0 0.0
      %1389 = vmatpush2.msra.mxu0 0.0
      %1390 = vmatprep.subr.mxu0 0.0
      %1391 = vmatpush2.msra.mxu0 0.0
      %1392 = vmatprep.subr.mxu0 0.0
      %1393 = vmatpush2.msra.mxu0 0.0
      %1394 = vmatprep.subr.mxu0 0.0
      %1395 = vmatpush2.msra.mxu0 0.0
      %1396 = vmatprep.subr.mxu0 0.0
      %1397 = vmatpush2.msra.mxu0 0.0
      %1398 = vmatprep.subr.mxu0 0.0
      %1399 = vmatpush2.msra.mxu0 0.0
      %1400 = vmatprep.subr.mxu0 0.0
      %1401 = vmatpush2.msra.mxu0 0.0
      %1402 = vmatprep.mubr.f32.mxu0 0.0
      %1403 = vmatmul.mubr.f32.gmra.mxu0 %v1315
      %v1404 = vpop.f32.mrf.mxu0
      %v1405 = vadd.f32 0.0, %v1404
      %v1406 = vpop.f32.mrf.mxu0
      %1407 = vmatprep.mubr.f32.mxu0 0.0
      %1408 = vmatmul.mubr.f32.gmra.mxu0 %v1318
      %v1409 = vpop.f32.mrf.mxu0
      %v1410 = vadd.f32 0.0, %v1409
      %v1411 = vpop.f32.mrf.mxu0
      %1412 = vmatprep.mubr.f32.mxu0 0.0
      %1413 = vmatmul.mubr.f32.gmra.mxu0 %v1321
      %v1414 = vpop.f32.mrf.mxu0
      %v1415 = vadd.f32 0.0, %v1414
      %v1416 = vpop.f32.mrf.mxu0
      %1417 = vmatprep.mubr.f32.mxu0 0.0
      %1418 = vmatmul.mubr.f32.gmra.mxu0 %v1324
      %v1419 = vpop.f32.mrf.mxu0
      %v1420 = vadd.f32 0.0, %v1419
      %v1421 = vpop.f32.mrf.mxu0
      %1422 = vmatprep.mubr.f32.mxu0 0.0
      %1423 = vmatmul.mubr.f32.gmra.mxu0 %v1327
      %v1424 = vpop.f32.mrf.mxu0
      %v1425 = vadd.f32 0.0, %v1424
      %v1426 = vpop.f32.mrf.mxu0
      %1427 = vmatprep.mubr.f32.mxu0 0.0
      %1428 = vmatmul.mubr.f32.gmra.mxu0 %v1330
      %v1429 = vpop.f32.mrf.mxu0
      %v1430 = vadd.f32 0.0, %v1429
      %v1431 = vpop.f32.mrf.mxu0
      %1432 = vmatprep.mubr.f32.mxu0 0.0
      %1433 = vmatmul.mubr.f32.gmra.mxu0 %v1333
      %v1434 = vpop.f32.mrf.mxu0
      %v1435 = vadd.f32 0.0, %v1434
      %v1436 = vpop.f32.mrf.mxu0
      %1437 = vmatprep.mubr.f32.mxu0 0.0
      %1438 = vmatmul.mubr.f32.gmra.mxu0 %v1336
      %v1439 = vpop.f32.mrf.mxu0
      %v1440 = vadd.f32 0.0, %v1439
      %v1441 = vpop.f32.mrf.mxu0
      %1442 = vdwg.mxu0
      %v1443 = vsub.f32 %v1121, %v1259
      %v1444 = vsub.f32 %v1126, %v1264
      %v1445 = vsub.f32 %v1131, %v1269
      %v1446 = vsub.f32 %v1136, %v1274
      %v1447 = vsub.f32 %v1141, %v1279
      %v1448 = vsub.f32 %v1146, %v1284
      %v1449 = vsub.f32 %v1151, %v1289
      %v1450 = vsub.f32 %v1156, %v1294
      %v1451 = vsub.f32 %v1405, %v1121
      %v1452 = vsub.f32 %v1410, %v1126
      %v1453 = vsub.f32 %v1415, %v1131
      %v1454 = vsub.f32 %v1420, %v1136
      %v1455 = vsub.f32 %v1425, %v1141
      %v1456 = vsub.f32 %v1430, %v1146
      %v1457 = vsub.f32 %v1435, %v1151
      %v1458 = vsub.f32 %v1440, %v1156
      %v1459 = vsub.f32 %v1451, %v1259
      %v1460 = vsub.f32 %v1452, %v1264
      %v1461 = vsub.f32 %v1453, %v1269
      %v1462 = vsub.f32 %v1454, %v1274
      %v1463 = vsub.f32 %v1455, %v1279
      %v1464 = vsub.f32 %v1456, %v1284
      %v1465 = vsub.f32 %v1457, %v1289
      %v1466 = vsub.f32 %v1458, %v1294
      %s1467 = scalar_lea.vmem [#allocation8], 384
      %v1468 = vld [vmem:[%s1467] sm:$0xff]
      %v1469 = vld [vmem:[%s1467 + $0x8] sm:$0xff]
      %v1470 = vld [vmem:[%s1467 + $0x10] sm:$0xff]
      %v1471 = vld [vmem:[%s1467 + $0x18] sm:$0xff]
      %v1472 = vld [vmem:[%s1467 + $0x20] sm:$0xff]
      %v1473 = vld [vmem:[%s1467 + $0x28] sm:$0xff]
      %v1474 = vld [vmem:[%s1467 + $0x30] sm:$0xff]
      %v1475 = vld [vmem:[%s1467 + $0x38] sm:$0xff]
      %v1476 = vld [vmem:[%s1467 + $0x40] sm:$0xff]
      %v1477 = vld [vmem:[%s1467 + $0x48] sm:$0xff]
      %v1478 = vld [vmem:[%s1467 + $0x50] sm:$0xff]
      %v1479 = vld [vmem:[%s1467 + $0x58] sm:$0xff]
      %v1480 = vld [vmem:[%s1467 + $0x60] sm:$0xff]
      %v1481 = vld [vmem:[%s1467 + $0x68] sm:$0xff]
      %v1482 = vld [vmem:[%s1467 + $0x70] sm:$0xff]
      %v1483 = vld [vmem:[%s1467 + $0x78] sm:$0xff]
      %1484 = vmatprep.subr.mxu0 0.0
      %1485 = vmatpush1.msra.mxu0 %v1483
      %1486 = vmatprep.subr.mxu0 0.0
      %1487 = vmatpush1.msra.mxu0 %v1482
      %1488 = vmatprep.subr.mxu0 0.0
      %1489 = vmatpush1.msra.mxu0 %v1481
      %1490 = vmatprep.subr.mxu0 0.0
      %1491 = vmatpush1.msra.mxu0 %v1480
      %1492 = vmatprep.subr.mxu0 0.0
      %1493 = vmatpush1.msra.mxu0 %v1479
      %1494 = vmatprep.subr.mxu0 0.0
      %1495 = vmatpush1.msra.mxu0 %v1478
      %1496 = vmatprep.subr.mxu0 0.0
      %1497 = vmatpush1.msra.mxu0 %v1477
      %1498 = vmatprep.subr.mxu0 0.0
      %1499 = vmatpush1.msra.mxu0 %v1476
      %1500 = vmatprep.subr.mxu0 0.0
      %1501 = vmatpush1.msra.mxu0 %v1475
      %1502 = vmatprep.subr.mxu0 0.0
      %1503 = vmatpush1.msra.mxu0 %v1474
      %1504 = vmatprep.subr.mxu0 0.0
      %1505 = vmatpush1.msra.mxu0 %v1473
      %1506 = vmatprep.subr.mxu0 0.0
      %1507 = vmatpush1.msra.mxu0 %v1472
      %1508 = vmatprep.subr.mxu0 0.0
      %1509 = vmatpush1.msra.mxu0 %v1471
      %1510 = vmatprep.subr.mxu0 0.0
      %1511 = vmatpush1.msra.mxu0 %v1470
      %1512 = vmatprep.subr.mxu0 0.0
      %1513 = vmatpush1.msra.mxu0 %v1469
      %1514 = vmatprep.subr.mxu0 0.0
      %1515 = vmatpush1.msra.mxu0 %v1468
      %1516 = vmatprep.subr.mxu0 0.0
      %1517 = vmatpush2.msra.mxu0 0.0
      %1518 = vmatprep.subr.mxu0 0.0
      %1519 = vmatpush2.msra.mxu0 0.0
      %1520 = vmatprep.subr.mxu0 0.0
      %1521 = vmatpush2.msra.mxu0 0.0
      %1522 = vmatprep.subr.mxu0 0.0
      %1523 = vmatpush2.msra.mxu0 0.0
      %1524 = vmatprep.subr.mxu0 0.0
      %1525 = vmatpush2.msra.mxu0 0.0
      %1526 = vmatprep.subr.mxu0 0.0
      %1527 = vmatpush2.msra.mxu0 0.0
      %1528 = vmatprep.subr.mxu0 0.0
      %1529 = vmatpush2.msra.mxu0 0.0
      %1530 = vmatprep.subr.mxu0 0.0
      %1531 = vmatpush2.msra.mxu0 0.0
      %1532 = vmatprep.subr.mxu0 0.0
      %1533 = vmatpush2.msra.mxu0 0.0
      %1534 = vmatprep.subr.mxu0 0.0
      %1535 = vmatpush2.msra.mxu0 0.0
      %1536 = vmatprep.subr.mxu0 0.0
      %1537 = vmatpush2.msra.mxu0 0.0
      %1538 = vmatprep.subr.mxu0 0.0
      %1539 = vmatpush2.msra.mxu0 0.0
      %1540 = vmatprep.subr.mxu0 0.0
      %1541 = vmatpush2.msra.mxu0 0.0
      %1542 = vmatprep.subr.mxu0 0.0
      %1543 = vmatpush2.msra.mxu0 0.0
      %1544 = vmatprep.subr.mxu0 0.0
      %1545 = vmatpush2.msra.mxu0 0.0
      %1546 = vmatprep.subr.mxu0 0.0
      %1547 = vmatpush2.msra.mxu0 0.0
      %1548 = vmatprep.mubr.f32.mxu0 0.0
      %1549 = vmatmul.mubr.f32.gmra.mxu0 %v1443
      %v1550 = vpop.f32.mrf.mxu0
      %v1551 = vadd.f32 0.0, %v1550
      %v1552 = vpop.f32.mrf.mxu0
      %1553 = vmatprep.mubr.f32.mxu0 0.0
      %1554 = vmatmul.mubr.f32.gmra.mxu0 %v1444
      %v1555 = vpop.f32.mrf.mxu0
      %v1556 = vadd.f32 0.0, %v1555
      %v1557 = vpop.f32.mrf.mxu0
      %1558 = vmatprep.mubr.f32.mxu0 0.0
      %1559 = vmatmul.mubr.f32.gmra.mxu0 %v1445
      %v1560 = vpop.f32.mrf.mxu0
      %v1561 = vadd.f32 0.0, %v1560
      %v1562 = vpop.f32.mrf.mxu0
      %1563 = vmatprep.mubr.f32.mxu0 0.0
      %1564 = vmatmul.mubr.f32.gmra.mxu0 %v1446
      %v1565 = vpop.f32.mrf.mxu0
      %v1566 = vadd.f32 0.0, %v1565
      %v1567 = vpop.f32.mrf.mxu0
      %1568 = vmatprep.mubr.f32.mxu0 0.0
      %1569 = vmatmul.mubr.f32.gmra.mxu0 %v1447
      %v1570 = vpop.f32.mrf.mxu0
      %v1571 = vadd.f32 0.0, %v1570
      %v1572 = vpop.f32.mrf.mxu0
      %1573 = vmatprep.mubr.f32.mxu0 0.0
      %1574 = vmatmul.mubr.f32.gmra.mxu0 %v1448
      %v1575 = vpop.f32.mrf.mxu0
      %v1576 = vadd.f32 0.0, %v1575
      %v1577 = vpop.f32.mrf.mxu0
      %1578 = vmatprep.mubr.f32.mxu0 0.0
      %1579 = vmatmul.mubr.f32.gmra.mxu0 %v1449
      %v1580 = vpop.f32.mrf.mxu0
      %v1581 = vadd.f32 0.0, %v1580
      %v1582 = vpop.f32.mrf.mxu0
      %1583 = vmatprep.mubr.f32.mxu0 0.0
      %1584 = vmatmul.mubr.f32.gmra.mxu0 %v1450
      %v1585 = vpop.f32.mrf.mxu0
      %v1586 = vadd.f32 0.0, %v1585
      %v1587 = vpop.f32.mrf.mxu0
      %1588 = vdwg.mxu0
      %s1589 = scalar_lea.vmem [#allocation8], 512
      %v1590 = vld [vmem:[%s1589] sm:$0xff]
      %v1591 = vld [vmem:[%s1589 + $0x8] sm:$0xff]
      %v1592 = vld [vmem:[%s1589 + $0x10] sm:$0xff]
      %v1593 = vld [vmem:[%s1589 + $0x18] sm:$0xff]
      %v1594 = vld [vmem:[%s1589 + $0x20] sm:$0xff]
      %v1595 = vld [vmem:[%s1589 + $0x28] sm:$0xff]
      %v1596 = vld [vmem:[%s1589 + $0x30] sm:$0xff]
      %v1597 = vld [vmem:[%s1589 + $0x38] sm:$0xff]
      %v1598 = vld [vmem:[%s1589 + $0x40] sm:$0xff]
      %v1599 = vld [vmem:[%s1589 + $0x48] sm:$0xff]
      %v1600 = vld [vmem:[%s1589 + $0x50] sm:$0xff]
      %v1601 = vld [vmem:[%s1589 + $0x58] sm:$0xff]
      %v1602 = vld [vmem:[%s1589 + $0x60] sm:$0xff]
      %v1603 = vld [vmem:[%s1589 + $0x68] sm:$0xff]
      %v1604 = vld [vmem:[%s1589 + $0x70] sm:$0xff]
      %v1605 = vld [vmem:[%s1589 + $0x78] sm:$0xff]
      %1606 = vmatprep.subr.mxu0 0.0
      %1607 = vmatpush1.msra.mxu0 %v1605
      %1608 = vmatprep.subr.mxu0 0.0
      %1609 = vmatpush1.msra.mxu0 %v1604
      %1610 = vmatprep.subr.mxu0 0.0
      %1611 = vmatpush1.msra.mxu0 %v1603
      %1612 = vmatprep.subr.mxu0 0.0
      %1613 = vmatpush1.msra.mxu0 %v1602
      %1614 = vmatprep.subr.mxu0 0.0
      %1615 = vmatpush1.msra.mxu0 %v1601
      %1616 = vmatprep.subr.mxu0 0.0
      %1617 = vmatpush1.msra.mxu0 %v1600
      %1618 = vmatprep.subr.mxu0 0.0
      %1619 = vmatpush1.msra.mxu0 %v1599
      %1620 = vmatprep.subr.mxu0 0.0
      %1621 = vmatpush1.msra.mxu0 %v1598
      %1622 = vmatprep.subr.mxu0 0.0
      %1623 = vmatpush1.msra.mxu0 %v1597
      %1624 = vmatprep.subr.mxu0 0.0
      %1625 = vmatpush1.msra.mxu0 %v1596
      %1626 = vmatprep.subr.mxu0 0.0
      %1627 = vmatpush1.msra.mxu0 %v1595
      %1628 = vmatprep.subr.mxu0 0.0
      %1629 = vmatpush1.msra.mxu0 %v1594
      %1630 = vmatprep.subr.mxu0 0.0
      %1631 = vmatpush1.msra.mxu0 %v1593
      %1632 = vmatprep.subr.mxu0 0.0
      %1633 = vmatpush1.msra.mxu0 %v1592
      %1634 = vmatprep.subr.mxu0 0.0
      %1635 = vmatpush1.msra.mxu0 %v1591
      %1636 = vmatprep.subr.mxu0 0.0
      %1637 = vmatpush1.msra.mxu0 %v1590
      %1638 = vmatprep.subr.mxu0 0.0
      %1639 = vmatpush2.msra.mxu0 0.0
      %1640 = vmatprep.subr.mxu0 0.0
      %1641 = vmatpush2.msra.mxu0 0.0
      %1642 = vmatprep.subr.mxu0 0.0
      %1643 = vmatpush2.msra.mxu0 0.0
      %1644 = vmatprep.subr.mxu0 0.0
      %1645 = vmatpush2.msra.mxu0 0.0
      %1646 = vmatprep.subr.mxu0 0.0
      %1647 = vmatpush2.msra.mxu0 0.0
      %1648 = vmatprep.subr.mxu0 0.0
      %1649 = vmatpush2.msra.mxu0 0.0
      %1650 = vmatprep.subr.mxu0 0.0
      %1651 = vmatpush2.msra.mxu0 0.0
      %1652 = vmatprep.subr.mxu0 0.0
      %1653 = vmatpush2.msra.mxu0 0.0
      %1654 = vmatprep.subr.mxu0 0.0
      %1655 = vmatpush2.msra.mxu0 0.0
      %1656 = vmatprep.subr.mxu0 0.0
      %1657 = vmatpush2.msra.mxu0 0.0
      %1658 = vmatprep.subr.mxu0 0.0
      %1659 = vmatpush2.msra.mxu0 0.0
      %1660 = vmatprep.subr.mxu0 0.0
      %1661 = vmatpush2.msra.mxu0 0.0
      %1662 = vmatprep.subr.mxu0 0.0
      %1663 = vmatpush2.msra.mxu0 0.0
      %1664 = vmatprep.subr.mxu0 0.0
      %1665 = vmatpush2.msra.mxu0 0.0
      %1666 = vmatprep.subr.mxu0 0.0
      %1667 = vmatpush2.msra.mxu0 0.0
      %1668 = vmatprep.subr.mxu0 0.0
      %1669 = vmatpush2.msra.mxu0 0.0
      %1670 = vmatprep.mubr.f32.mxu0 0.0
      %1671 = vmatmul.mubr.f32.gmra.mxu0 %v1459
      %v1672 = vpop.f32.mrf.mxu0
      %v1673 = vadd.f32 0.0, %v1672
      %v1674 = vpop.f32.mrf.mxu0
      %1675 = vmatprep.mubr.f32.mxu0 0.0
      %1676 = vmatmul.mubr.f32.gmra.mxu0 %v1460
      %v1677 = vpop.f32.mrf.mxu0
      %v1678 = vadd.f32 0.0, %v1677
      %v1679 = vpop.f32.mrf.mxu0
      %1680 = vmatprep.mubr.f32.mxu0 0.0
      %1681 = vmatmul.mubr.f32.gmra.mxu0 %v1461
      %v1682 = vpop.f32.mrf.mxu0
      %v1683 = vadd.f32 0.0, %v1682
      %v1684 = vpop.f32.mrf.mxu0
      %1685 = vmatprep.mubr.f32.mxu0 0.0
      %1686 = vmatmul.mubr.f32.gmra.mxu0 %v1462
      %v1687 = vpop.f32.mrf.mxu0
      %v1688 = vadd.f32 0.0, %v1687
      %v1689 = vpop.f32.mrf.mxu0
      %1690 = vmatprep.mubr.f32.mxu0 0.0
      %1691 = vmatmul.mubr.f32.gmra.mxu0 %v1463
      %v1692 = vpop.f32.mrf.mxu0
      %v1693 = vadd.f32 0.0, %v1692
      %v1694 = vpop.f32.mrf.mxu0
      %1695 = vmatprep.mubr.f32.mxu0 0.0
      %1696 = vmatmul.mubr.f32.gmra.mxu0 %v1464
      %v1697 = vpop.f32.mrf.mxu0
      %v1698 = vadd.f32 0.0, %v1697
      %v1699 = vpop.f32.mrf.mxu0
      %1700 = vmatprep.mubr.f32.mxu0 0.0
      %1701 = vmatmul.mubr.f32.gmra.mxu0 %v1465
      %v1702 = vpop.f32.mrf.mxu0
      %v1703 = vadd.f32 0.0, %v1702
      %v1704 = vpop.f32.mrf.mxu0
      %1705 = vmatprep.mubr.f32.mxu0 0.0
      %1706 = vmatmul.mubr.f32.gmra.mxu0 %v1466
      %v1707 = vpop.f32.mrf.mxu0
      %v1708 = vadd.f32 0.0, %v1707
      %v1709 = vpop.f32.mrf.mxu0
      %1710 = vdwg.mxu0
      %v1711 = vadd.f32 %v1443, %v1459
      %v1712 = vadd.f32 %v1444, %v1460
      %v1713 = vadd.f32 %v1445, %v1461
      %v1714 = vadd.f32 %v1446, %v1462
      %v1715 = vadd.f32 %v1447, %v1463
      %v1716 = vadd.f32 %v1448, %v1464
      %v1717 = vadd.f32 %v1449, %v1465
      %v1718 = vadd.f32 %v1450, %v1466
      %s1719 = scalar_lea.vmem [#allocation8], 640
      %v1720 = vld [vmem:[%s1719] sm:$0xff]
      %v1721 = vld [vmem:[%s1719 + $0x8] sm:$0xff]
      %v1722 = vld [vmem:[%s1719 + $0x10] sm:$0xff]
      %v1723 = vld [vmem:[%s1719 + $0x18] sm:$0xff]
      %v1724 = vld [vmem:[%s1719 + $0x20] sm:$0xff]
      %v1725 = vld [vmem:[%s1719 + $0x28] sm:$0xff]
      %v1726 = vld [vmem:[%s1719 + $0x30] sm:$0xff]
      %v1727 = vld [vmem:[%s1719 + $0x38] sm:$0xff]
      %v1728 = vld [vmem:[%s1719 + $0x40] sm:$0xff]
      %v1729 = vld [vmem:[%s1719 + $0x48] sm:$0xff]
      %v1730 = vld [vmem:[%s1719 + $0x50] sm:$0xff]
      %v1731 = vld [vmem:[%s1719 + $0x58] sm:$0xff]
      %v1732 = vld [vmem:[%s1719 + $0x60] sm:$0xff]
      %v1733 = vld [vmem:[%s1719 + $0x68] sm:$0xff]
      %v1734 = vld [vmem:[%s1719 + $0x70] sm:$0xff]
      %v1735 = vld [vmem:[%s1719 + $0x78] sm:$0xff]
      %1736 = vmatprep.subr.mxu0 0.0
      %1737 = vmatpush1.msra.mxu0 %v1735
      %1738 = vmatprep.subr.mxu0 0.0
      %1739 = vmatpush1.msra.mxu0 %v1734
      %1740 = vmatprep.subr.mxu0 0.0
      %1741 = vmatpush1.msra.mxu0 %v1733
      %1742 = vmatprep.subr.mxu0 0.0
      %1743 = vmatpush1.msra.mxu0 %v1732
      %1744 = vmatprep.subr.mxu0 0.0
      %1745 = vmatpush1.msra.mxu0 %v1731
      %1746 = vmatprep.subr.mxu0 0.0
      %1747 = vmatpush1.msra.mxu0 %v1730
      %1748 = vmatprep.subr.mxu0 0.0
      %1749 = vmatpush1.msra.mxu0 %v1729
      %1750 = vmatprep.subr.mxu0 0.0
      %1751 = vmatpush1.msra.mxu0 %v1728
      %1752 = vmatprep.subr.mxu0 0.0
      %1753 = vmatpush1.msra.mxu0 %v1727
      %1754 = vmatprep.subr.mxu0 0.0
      %1755 = vmatpush1.msra.mxu0 %v1726
      %1756 = vmatprep.subr.mxu0 0.0
      %1757 = vmatpush1.msra.mxu0 %v1725
      %1758 = vmatprep.subr.mxu0 0.0
      %1759 = vmatpush1.msra.mxu0 %v1724
      %1760 = vmatprep.subr.mxu0 0.0
      %1761 = vmatpush1.msra.mxu0 %v1723
      %1762 = vmatprep.subr.mxu0 0.0
      %1763 = vmatpush1.msra.mxu0 %v1722
      %1764 = vmatprep.subr.mxu0 0.0
      %1765 = vmatpush1.msra.mxu0 %v1721
      %1766 = vmatprep.subr.mxu0 0.0
      %1767 = vmatpush1.msra.mxu0 %v1720
      %1768 = vmatprep.subr.mxu0 0.0
      %1769 = vmatpush2.msra.mxu0 0.0
      %1770 = vmatprep.subr.mxu0 0.0
      %1771 = vmatpush2.msra.mxu0 0.0
      %1772 = vmatprep.subr.mxu0 0.0
      %1773 = vmatpush2.msra.mxu0 0.0
      %1774 = vmatprep.subr.mxu0 0.0
      %1775 = vmatpush2.msra.mxu0 0.0
      %1776 = vmatprep.subr.mxu0 0.0
      %1777 = vmatpush2.msra.mxu0 0.0
      %1778 = vmatprep.subr.mxu0 0.0
      %1779 = vmatpush2.msra.mxu0 0.0
      %1780 = vmatprep.subr.mxu0 0.0
      %1781 = vmatpush2.msra.mxu0 0.0
      %1782 = vmatprep.subr.mxu0 0.0
      %1783 = vmatpush2.msra.mxu0 0.0
      %1784 = vmatprep.subr.mxu0 0.0
      %1785 = vmatpush2.msra.mxu0 0.0
      %1786 = vmatprep.subr.mxu0 0.0
      %1787 = vmatpush2.msra.mxu0 0.0
      %1788 = vmatprep.subr.mxu0 0.0
      %1789 = vmatpush2.msra.mxu0 0.0
      %1790 = vmatprep.subr.mxu0 0.0
      %1791 = vmatpush2.msra.mxu0 0.0
      %1792 = vmatprep.subr.mxu0 0.0
      %1793 = vmatpush2.msra.mxu0 0.0
      %1794 = vmatprep.subr.mxu0 0.0
      %1795 = vmatpush2.msra.mxu0 0.0
      %1796 = vmatprep.subr.mxu0 0.0
      %1797 = vmatpush2.msra.mxu0 0.0
      %1798 = vmatprep.subr.mxu0 0.0
      %1799 = vmatpush2.msra.mxu0 0.0
      %1800 = vmatprep.mubr.f32.mxu0 0.0
      %1801 = vmatmul.mubr.f32.gmra.mxu0 %v1711
      %v1802 = vpop.f32.mrf.mxu0
      %v1803 = vadd.f32 0.0, %v1802
      %v1804 = vpop.f32.mrf.mxu0
      %1805 = vmatprep.mubr.f32.mxu0 0.0
      %1806 = vmatmul.mubr.f32.gmra.mxu0 %v1712
      %v1807 = vpop.f32.mrf.mxu0
      %v1808 = vadd.f32 0.0, %v1807
      %v1809 = vpop.f32.mrf.mxu0
      %1810 = vmatprep.mubr.f32.mxu0 0.0
      %1811 = vmatmul.mubr.f32.gmra.mxu0 %v1713
      %v1812 = vpop.f32.mrf.mxu0
      %v1813 = vadd.f32 0.0, %v1812
      %v1814 = vpop.f32.mrf.mxu0
      %1815 = vmatprep.mubr.f32.mxu0 0.0
      %1816 = vmatmul.mubr.f32.gmra.mxu0 %v1714
      %v1817 = vpop.f32.mrf.mxu0
      %v1818 = vadd.f32 0.0, %v1817
      %v1819 = vpop.f32.mrf.mxu0
      %1820 = vmatprep.mubr.f32.mxu0 0.0
      %1821 = vmatmul.mubr.f32.gmra.mxu0 %v1715
      %v1822 = vpop.f32.mrf.mxu0
      %v1823 = vadd.f32 0.0, %v1822
      %v1824 = vpop.f32.mrf.mxu0
      %1825 = vmatprep.mubr.f32.mxu0 0.0
      %1826 = vmatmul.mubr.f32.gmra.mxu0 %v1716
      %v1827 = vpop.f32.mrf.mxu0
      %v1828 = vadd.f32 0.0, %v1827
      %v1829 = vpop.f32.mrf.mxu0
      %1830 = vmatprep.mubr.f32.mxu0 0.0
      %1831 = vmatmul.mubr.f32.gmra.mxu0 %v1717
      %v1832 = vpop.f32.mrf.mxu0
      %v1833 = vadd.f32 0.0, %v1832
      %v1834 = vpop.f32.mrf.mxu0
      %1835 = vmatprep.mubr.f32.mxu0 0.0
      %1836 = vmatmul.mubr.f32.gmra.mxu0 %v1718
      %v1837 = vpop.f32.mrf.mxu0
      %v1838 = vadd.f32 0.0, %v1837
      %v1839 = vpop.f32.mrf.mxu0
      %1840 = vdwg.mxu0
      %v1841 = vsub.f32 %v1551, %v1673
      %v1842 = vsub.f32 %v1556, %v1678
      %v1843 = vsub.f32 %v1561, %v1683
      %v1844 = vsub.f32 %v1566, %v1688
      %v1845 = vsub.f32 %v1571, %v1693
      %v1846 = vsub.f32 %v1576, %v1698
      %v1847 = vsub.f32 %v1581, %v1703
      %v1848 = vsub.f32 %v1586, %v1708
      %v1849 = vsub.f32 %v1803, %v1551
      %v1850 = vsub.f32 %v1808, %v1556
      %v1851 = vsub.f32 %v1813, %v1561
      %v1852 = vsub.f32 %v1818, %v1566
      %v1853 = vsub.f32 %v1823, %v1571
      %v1854 = vsub.f32 %v1828, %v1576
      %v1855 = vsub.f32 %v1833, %v1581
      %v1856 = vsub.f32 %v1838, %v1586
      %v1857 = vsub.f32 %v1849, %v1673
      %v1858 = vsub.f32 %v1850, %v1678
      %v1859 = vsub.f32 %v1851, %v1683
      %v1860 = vsub.f32 %v1852, %v1688
      %v1861 = vsub.f32 %v1853, %v1693
      %v1862 = vsub.f32 %v1854, %v1698
      %v1863 = vsub.f32 %v1855, %v1703
      %v1864 = vsub.f32 %v1856, %v1708
      %s1865 = scalar_lea.vmem [#allocation5], 256
      %v1866 = vld [vmem:[%s1865] sm:$0xff]
      %v1867 = vld [vmem:[%s1865 + $0x8] sm:$0xff]
      %v1868 = vld [vmem:[%s1865 + $0x10] sm:$0xff]
      %v1869 = vld [vmem:[%s1865 + $0x18] sm:$0xff]
      %v1870 = vld [vmem:[%s1865 + $0x20] sm:$0xff]
      %v1871 = vld [vmem:[%s1865 + $0x28] sm:$0xff]
      %v1872 = vld [vmem:[%s1865 + $0x30] sm:$0xff]
      %v1873 = vld [vmem:[%s1865 + $0x38] sm:$0xff]
      %v1874 = vmul.f32 %v1841, %v1866
      %v1875 = vmul.f32 %v1842, %v1867
      %v1876 = vmul.f32 %v1843, %v1868
      %v1877 = vmul.f32 %v1844, %v1869
      %v1878 = vmul.f32 %v1845, %v1870
      %v1879 = vmul.f32 %v1846, %v1871
      %v1880 = vmul.f32 %v1847, %v1872
      %v1881 = vmul.f32 %v1848, %v1873
      %v1882 = vmul.f32 %v1857, %v1866
      %v1883 = vmul.f32 %v1858, %v1867
      %v1884 = vmul.f32 %v1859, %v1868
      %v1885 = vmul.f32 %v1860, %v1869
      %v1886 = vmul.f32 %v1861, %v1870
      %v1887 = vmul.f32 %v1862, %v1871
      %v1888 = vmul.f32 %v1863, %v1872
      %v1889 = vmul.f32 %v1864, %v1873
      %s1890 = smul.u32 %s91, 2
      %s1891 = smul.u32 %s1890, 64
      %s1892 = scalar_lea.vmem [#allocation2], %s1891
      %v1893 = vld [vmem:[%s1892] sm:$0xff]
      %v1894 = vld [vmem:[%s1892 + $0x8] sm:$0xff]
      %v1895 = vld [vmem:[%s1892 + $0x10] sm:$0xff]
      %v1896 = vld [vmem:[%s1892 + $0x18] sm:$0xff]
      %v1897 = vld [vmem:[%s1892 + $0x20] sm:$0xff]
      %v1898 = vld [vmem:[%s1892 + $0x28] sm:$0xff]
      %v1899 = vld [vmem:[%s1892 + $0x30] sm:$0xff]
      %v1900 = vld [vmem:[%s1892 + $0x38] sm:$0xff]
      %s1901 = sadd.s32 %s1890, 1
      %s1902 = smul.u32 %s1901, 64
      %s1903 = scalar_lea.vmem [#allocation2], %s1902
      %v1904 = vld [vmem:[%s1903] sm:$0xff]
      %v1905 = vld [vmem:[%s1903 + $0x8] sm:$0xff]
      %v1906 = vld [vmem:[%s1903 + $0x10] sm:$0xff]
      %v1907 = vld [vmem:[%s1903 + $0x18] sm:$0xff]
      %v1908 = vld [vmem:[%s1903 + $0x20] sm:$0xff]
      %v1909 = vld [vmem:[%s1903 + $0x28] sm:$0xff]
      %v1910 = vld [vmem:[%s1903 + $0x30] sm:$0xff]
      %v1911 = vld [vmem:[%s1903 + $0x38] sm:$0xff]
      %v1912 = vmul.f32 %v1874, %v1893
      %v1913 = vmul.f32 %v1875, %v1894
      %v1914 = vmul.f32 %v1876, %v1895
      %v1915 = vmul.f32 %v1877, %v1896
      %v1916 = vmul.f32 %v1878, %v1897
      %v1917 = vmul.f32 %v1879, %v1898
      %v1918 = vmul.f32 %v1880, %v1899
      %v1919 = vmul.f32 %v1881, %v1900
      %v1920 = vmul.f32 %v1882, %v1904
      %v1921 = vmul.f32 %v1883, %v1905
      %v1922 = vmul.f32 %v1884, %v1906
      %v1923 = vmul.f32 %v1885, %v1907
      %v1924 = vmul.f32 %v1886, %v1908
      %v1925 = vmul.f32 %v1887, %v1909
      %v1926 = vmul.f32 %v1888, %v1910
      %v1927 = vmul.f32 %v1889, %v1911
      %v1928 = vsub.f32 %v1912, %v1920
      %v1929 = vsub.f32 %v1913, %v1921
      %v1930 = vsub.f32 %v1914, %v1922
      %v1931 = vsub.f32 %v1915, %v1923
      %v1932 = vsub.f32 %v1916, %v1924
      %v1933 = vsub.f32 %v1917, %v1925
      %v1934 = vsub.f32 %v1918, %v1926
      %v1935 = vsub.f32 %v1919, %v1927
      %v1936 = vmul.f32 %v1874, %v1904
      %v1937 = vmul.f32 %v1875, %v1905
      %v1938 = vmul.f32 %v1876, %v1906
      %v1939 = vmul.f32 %v1877, %v1907
      %v1940 = vmul.f32 %v1878, %v1908
      %v1941 = vmul.f32 %v1879, %v1909
      %v1942 = vmul.f32 %v1880, %v1910
      %v1943 = vmul.f32 %v1881, %v1911
      %v1944 = vmul.f32 %v1882, %v1893
      %v1945 = vmul.f32 %v1883, %v1894
      %v1946 = vmul.f32 %v1884, %v1895
      %v1947 = vmul.f32 %v1885, %v1896
      %v1948 = vmul.f32 %v1886, %v1897
      %v1949 = vmul.f32 %v1887, %v1898
      %v1950 = vmul.f32 %v1888, %v1899
      %v1951 = vmul.f32 %v1889, %v1900
      %v1952 = vadd.f32 %v1936, %v1944
      %v1953 = vadd.f32 %v1937, %v1945
      %v1954 = vadd.f32 %v1938, %v1946
      %v1955 = vadd.f32 %v1939, %v1947
      %v1956 = vadd.f32 %v1940, %v1948
      %v1957 = vadd.f32 %v1941, %v1949
      %v1958 = vadd.f32 %v1942, %v1950
      %v1959 = vadd.f32 %v1943, %v1951
    $region38: #{tpu_custom_call.1} parent=1 // loop_footer
      %s95 = sadd.s32 1, %s91
    $region39: #{tpu_custom_call.1} parent=1 // loop_footer_branch
      %90 = sbr.rel target = $region35
    $region40: #{tpu_custom_call.1} parent=1 // loop_exit
      _
    %v1960 = vmul.f32 %v96, %v96
    %v1961 = vmul.f32 %v97, %v97
    %v1962 = vmul.f32 %v98, %v98
    %v1963 = vmul.f32 %v99, %v99
    %v1964 = vmul.f32 %v100, %v100
    %v1965 = vmul.f32 %v101, %v101
    %v1966 = vmul.f32 %v102, %v102
    %v1967 = vmul.f32 %v103, %v103
    %v1968 = vmul.f32 %v104, %v104
    %v1969 = vmul.f32 %v105, %v105
    %v1970 = vmul.f32 %v106, %v106
    %v1971 = vmul.f32 %v107, %v107
    %v1972 = vmul.f32 %v108, %v108
    %v1973 = vmul.f32 %v109, %v109
    %v1974 = vmul.f32 %v110, %v110
    %v1975 = vmul.f32 %v111, %v111
    %v1976 = vadd.f32 %v1960, %v1968
    %v1977 = vadd.f32 %v1961, %v1969
    %v1978 = vadd.f32 %v1962, %v1970
    %v1979 = vadd.f32 %v1963, %v1971
    %v1980 = vadd.f32 %v1964, %v1972
    %v1981 = vadd.f32 %v1965, %v1973
    %v1982 = vadd.f32 %v1966, %v1974
    %v1983 = vadd.f32 %v1967, %v1975
    %1984 = vst [vmem:[#allocation10] sm:$0xff] %v1976
    %1985 = vst [vmem:[#allocation10 + $0x8] sm:$0xff] %v1977
    %1986 = vst [vmem:[#allocation10 + $0x10] sm:$0xff] %v1978
    %1987 = vst [vmem:[#allocation10 + $0x18] sm:$0xff] %v1979
    %1988 = vst [vmem:[#allocation10 + $0x20] sm:$0xff] %v1980
    %1989 = vst [vmem:[#allocation10 + $0x28] sm:$0xff] %v1981
    %1990 = vst [vmem:[#allocation10 + $0x30] sm:$0xff] %v1982
    %1991 = vst [vmem:[#allocation10 + $0x38] sm:$0xff] %v1983
    // Predicated region
    $region41: #{tpu_custom_call.1} parent=1 // pred_check
      _
    $region42: #{tpu_custom_call.1} parent=1 // pred_check_branch
      %1993 = sbr.rel (0) target = $region44
    $region43: #{tpu_custom_call.1} parent=1 // pred_region
      %s1995 = ssub.s32 1024, 1024
      %1996 = vsyncadd [#allocation4], %s1995
      %s1997 = sshll.u32 [#allocation10], 4
      %s1998 = int_to_ptr.vmem [resolvable:$true] %s1997
      %2003 = dma.vmem_to_hbm [thread:$0]  %s1998, 1024, %s4, [#allocation4], 128, 128, 8
    $region44: #{tpu_custom_call.1} parent=1 // pred_fallthru
      _
    // Predicated region
    $region45: #{tpu_custom_call.1} parent=1 // pred_check
      _
    $region46: #{tpu_custom_call.1} parent=1 // pred_check_branch
      %2005 = sbr.rel (0) target = $region48
    $region47: #{tpu_custom_call.1} parent=1 // pred_region
      %2006 = dma.done [#allocation4], 1024
    $region48: #{tpu_custom_call.1} parent=1 // pred_fallthru
      _
    %2007 = vsyncpa [#allocation3], 1
    %2008 = vsyncpa [#allocation6], 1
    %2009 = vsyncpa [#allocation9], 1
    %2010 = vsyncpa [#allocation4], 1

</llo_original>
